<compile_context>
chip_gen: v5e
topology: v5e:2x2
jax: 0.10.0
libtpu: 0.0.40
codegen_flags: <defaults>
</compile_context>

<pallas_src>
from functools import partial

import jax
import jax.numpy as jnp
from jax import lax
from jax.experimental import pallas as pl
from jax.experimental.pallas import tpu as pltpu

HID_DIM = 32
OUT_DIM = 1
_LANE = 128


def _mlp_kernel(pred_len, feat_dim, xn_ref, feat_ref, w_ref, out_ref, hpre_ref):
    """One tile of rows (rows on the lane axis).

    xn_ref  : (1, TM)              last observed pm25 per row
    feat_ref: (pred_len, F, TM)    future feature slices
    w_ref   : (H, 70 + F)          packed parameter slab
    out_ref : (pred_len, TM)       predictions
    hpre_ref: (pred_len, H, TM)    VMEM scratch for hoisted feature projection
    """
    F = feat_dim
    H = HID_DIM

    w = w_ref[...].astype(jnp.float32)           # tiny (H, 70+F) slab, load once
    w1t    = w[:, 0:H]                           # (H, H)  mlp[0].weight (transposed)
    w2t    = w[:, H:2 * H]                       # (H, H)  mlp[2].weight (transposed)
    wft    = w[:, 2 * H:2 * H + F]               # (H, F)  fc_in cols for features
    base = 2 * H + F
    w_in_x = w[:, base + 0:base + 1]             # (H, 1)  fc_in col for xn
    b_in   = w[:, base + 1:base + 2]             # (H, 1)
    b1     = w[:, base + 2:base + 3]             # (H, 1)
    b2     = w[:, base + 3:base + 4]             # (H, 1)
    w_out  = w[:, base + 4:base + 5]             # (H, 1)  fc_out.weight
    b_out  = w[0:1, base + 5:base + 6]           # (1, 1)  fc_out.bias

    def project(i):
        # xn-independent part of fc_in, hoisted out of the recurrence.
        f_i = feat_ref[i].astype(jnp.float32)                      # (F, TM)
        hpre_ref[i] = (jnp.dot(wft, f_i, preferred_element_type=jnp.float32)
                       + b_in)                                     # (H, TM)

    def step(i, xn):
        h = hpre_ref[i] + w_in_x * xn                              # (H, TM)
        h = jax.nn.sigmoid(
            jnp.dot(w1t, h, preferred_element_type=jnp.float32) + b1)
        h = jax.nn.sigmoid(
            jnp.dot(w2t, h, preferred_element_type=jnp.float32) + b2)
        # fc_out: VPU multiply + sublane reduction (no width-1 matmul).
        xn = jnp.sum(h * w_out, axis=0, keepdims=True) + b_out     # (1, TM)
        out_ref[pl.ds(i, 1), :] = xn.astype(out_ref.dtype)
        return xn

    xn = xn_ref[...].astype(jnp.float32)                           # (1, TM)

    if pred_len <= 8:
        # Small horizon: fully unrolled static loops.
        for i in range(pred_len):
            project(i)
        for i in range(pred_len):
            xn = step(i, xn)
    else:
        # Long horizon: bound live ranges / register pressure with fori_loop.
        def proj_body(i, carry):
            project(i)
            return carry

        lax.fori_loop(0, pred_len, proj_body, 0)
        lax.fori_loop(0, pred_len, step, xn, unroll=2)


def _round_up(x, m):
    return (x + m - 1) // m * m


def _choose_tile_m(m, max_tile=1024):
    """Large lane-dense tiles; keep >=2 grid steps when possible (v7x megacore)."""
    m128 = _round_up(max(m, 1), _LANE)
    if m128 <= 2 * _LANE:
        return m128
    half = _round_up(-(-m128 // 2), _LANE)
    return min(max_tile, half)


def mlp_forward(pm25_hist, feature, params, hist_len, pred_len, *, tile_m=None):
    B, _, N, _ = pm25_hist.shape
    in_dim = params["w_in"].shape[0]
    feat_dim = in_dim - 1
    M = B * N

    if tile_m is None:
        tile_m = _choose_tile_m(M)
    assert tile_m % _LANE == 0
    M_pad = _round_up(M, tile_m)

    # --- data layout: rows (b, n) flattened b-major and placed on lanes -----
    xn0 = pm25_hist[:, -1].reshape(M).astype(jnp.float32)
    xn0 = jnp.pad(xn0, (0, M_pad - M)).reshape(1, M_pad)            # (1, M_pad)

    feat = feature[:, hist_len:hist_len + pred_len]                 # (B, P, N, F)
    feat = jnp.transpose(feat, (1, 3, 0, 2)).reshape(pred_len, feat_dim, M)
    feat = jnp.pad(feat, ((0, 0), (0, 0), (0, M_pad - M))).astype(jnp.float32)

    # --- pack the 8 parameter tensors into one (H, 70+F) slab ---------------
    w_in = params["w_in"].astype(jnp.float32)                       # (in_dim, H)
    slab = jnp.concatenate(
        [params["w1"].T,                                            # (H, H)
         params["w2"].T,                                            # (H, H)
         w_in[1:, :].T,                                             # (H, F)
         w_in[0:1, :].T,                                            # (H, 1)
         params["b_in"].reshape(HID_DIM, 1),
         params["b1"].reshape(HID_DIM, 1),
         params["b2"].reshape(HID_DIM, 1),
         params["w_out"].reshape(HID_DIM, 1),
         jnp.broadcast_to(params["b_out"].reshape(1, 1), (HID_DIM, 1))],
        axis=1).astype(jnp.float32)
    C = slab.shape[1]

    # VMEM budget (explicit so v7x's 64 MiB / 32 MiB scoped default is safe).
    vmem_est = 4 * (2 * pred_len * feat_dim * tile_m   # feat, double-buffered
                    + 2 * pred_len * tile_m            # out, double-buffered
                    + 2 * tile_m                       # xn0
                    + 2 * HID_DIM * C                  # params
                    + pred_len * HID_DIM * tile_m)     # h_pre scratch
    vmem_limit = min(64 * 1024 * 1024, max(32 * 1024 * 1024, 2 * vmem_est))

    out = pl.pallas_call(
        partial(_mlp_kernel, pred_len, feat_dim),
        out_shape=jax.ShapeDtypeStruct((pred_len, M_pad), jnp.float32),
        grid=(M_pad // tile_m,),
        in_specs=[
            pl.BlockSpec((1, tile_m), lambda m: (0, m)),
            pl.BlockSpec((pred_len, feat_dim, tile_m), lambda m: (0, 0, m)),
            pl.BlockSpec((HID_DIM, C), lambda m: (0, 0)),
        ],
        out_specs=pl.BlockSpec((pred_len, tile_m), lambda m: (0, m)),
        scratch_shapes=[pltpu.VMEM((pred_len, HID_DIM, tile_m), jnp.float32)],
        compiler_params=pltpu.CompilerParams(
            dimension_semantics=("parallel",),
            vmem_limit_bytes=int(vmem_limit)),
    )(xn0, feat, slab)

    # (P, M_pad) -> (B, P, N, 1)   (matches torch.stack(pm25_pred, dim=1))
    out = out[:, :M].reshape(pred_len, B, N, 1)
    return jnp.transpose(out, (1, 0, 2, 3))


def init_params(key, in_dim):
    """Deterministic nn.Linear-style init. Weights stored as (fan_in, fan_out)."""
    ks = jax.random.split(key, 8)

    def lin(kw, kb, fan_in, fan_out):
        bound = 1.0 / float(fan_in) ** 0.5
        w = jax.random.uniform(kw, (fan_in, fan_out), jnp.float32, -bound, bound)
        b = jax.random.uniform(kb, (1, fan_out), jnp.float32, -bound, bound)
        return w, b

    w_in, b_in = lin(ks[0], ks[1], in_dim, HID_DIM)
    w1, b1 = lin(ks[2], ks[3], HID_DIM, HID_DIM)
    w2, b2 = lin(ks[4], ks[5], HID_DIM, HID_DIM)
    w_out, b_out = lin(ks[6], ks[7], HID_DIM, OUT_DIM)
    return dict(w_in=w_in, b_in=b_in, w1=w1, b1=b1, w2=w2, b2=b2,
                w_out=w_out, b_out=b_out)


def mlp_reference(pm25_hist, feature, params, hist_len, pred_len):
    """Pure-JAX mirror of the PyTorch forward (for verification)."""
    xn = pm25_hist[:, -1]
    preds = []
    for i in range(pred_len):
        x = jnp.concatenate([xn, feature[:, hist_len + i]], axis=-1)
        x = x @ params["w_in"] + params["b_in"]
        x = jax.nn.sigmoid(x @ params["w1"] + params["b1"])
        x = jax.nn.sigmoid(x @ params["w2"] + params["b2"])
        xn = x @ params["w_out"] + params["b_out"]
        preds.append(xn)
    return jnp.stack(preds, axis=1)


if __name__ == "__main__":
    B, N = 2, 16
    hist_len, pred_len, in_dim = 8, 4, 4   # in_dim = 1 (pm25) + 3 feature channels

    key = jax.random.PRNGKey(0)
    k1, k2, k3 = jax.random.split(key, 3)
    pm25_hist = jax.random.normal(k1, (B, hist_len, N, 1), jnp.float32)
    feature = jax.random.normal(k2, (B, hist_len + pred_len, N, in_dim - 1),
                                jnp.float32)
    params = init_params(k3, in_dim)

    out = mlp_forward(pm25_hist, feature, params, hist_len, pred_len)
    out = jax.block_until_ready(out)

    ref = mlp_reference(pm25_hist, feature, params, hist_len, pred_len)
    assert out.shape == (B, pred_len, N, 1), out.shape
    assert jnp.allclose(out, ref, atol=1e-5, rtol=1e-5), \
        float(jnp.max(jnp.abs(out - ref)))
    print("KERNEL_OK")
</pallas_src>

<mosaic_0001>
module attributes {stable_mosaic.version = 11 : i64} {
  func.func @_mlp_kernel(%arg0: i32, %arg1: memref<1x128xf32, #tpu.memory_space<vmem>>, %arg2: memref<4x3x128xf32, #tpu.memory_space<vmem>>, %arg3: memref<32x73xf32, #tpu.memory_space<vmem>>, %arg4: memref<4x128xf32, #tpu.memory_space<vmem>>, %arg5: memref<4x32x128xf32, #tpu.memory_space<vmem>>) attributes {dimension_semantics = [#tpu.dimension_semantics<parallel>], iteration_bounds = array<i64: 1>, scalar_prefetch = 0 : i64, scratch_operands = 1 : i64, tpu.core_type = #tpu.core_type<tc>, window_params = [{transform_indices = @transform_0, window_bounds = array<i64: 1, 128>}, {transform_indices = @transform_1, window_bounds = array<i64: 4, 3, 128>}, {pipeline_mode = #tpu.pipeline_mode<synchronous>, transform_indices = @transform_2, window_bounds = array<i64: 32, 73>}, {transform_indices = @transform_3, window_bounds = array<i64: 4, 128>}]} {
    %c0 = arith.constant 0 : index
    %c0_0 = arith.constant 0 : index
    %0 = vector.load %arg3[%c0, %c0_0] : memref<32x73xf32, #tpu.memory_space<vmem>>, vector<32x73xf32>
    %1 = vector.extract_strided_slice %0 {offsets = [0, 0], sizes = [32, 32], strides = [1, 1]} : vector<32x73xf32> to vector<32x32xf32>
    %2 = vector.extract_strided_slice %0 {offsets = [0, 32], sizes = [32, 32], strides = [1, 1]} : vector<32x73xf32> to vector<32x32xf32>
    %3 = vector.extract_strided_slice %0 {offsets = [0, 64], sizes = [32, 3], strides = [1, 1]} : vector<32x73xf32> to vector<32x3xf32>
    %4 = vector.extract_strided_slice %0 {offsets = [0, 67], sizes = [32, 1], strides = [1, 1]} : vector<32x73xf32> to vector<32x1xf32>
    %5 = vector.extract_strided_slice %0 {offsets = [0, 68], sizes = [32, 1], strides = [1, 1]} : vector<32x73xf32> to vector<32x1xf32>
    %6 = vector.extract_strided_slice %0 {offsets = [0, 69], sizes = [32, 1], strides = [1, 1]} : vector<32x73xf32> to vector<32x1xf32>
    %7 = vector.extract_strided_slice %0 {offsets = [0, 70], sizes = [32, 1], strides = [1, 1]} : vector<32x73xf32> to vector<32x1xf32>
    %8 = vector.extract_strided_slice %0 {offsets = [0, 71], sizes = [32, 1], strides = [1, 1]} : vector<32x73xf32> to vector<32x1xf32>
    %9 = vector.extract_strided_slice %0 {offsets = [0, 72], sizes = [1, 1], strides = [1, 1]} : vector<32x73xf32> to vector<1x1xf32>
    %c0_1 = arith.constant 0 : index
    %c0_2 = arith.constant 0 : index
    %10 = vector.load %arg1[%c0_1, %c0_2] : memref<1x128xf32, #tpu.memory_space<vmem>>, vector<1x128xf32>
    %c0_3 = arith.constant 0 : index
    %c0_4 = arith.constant 0 : index
    %c0_5 = arith.constant 0 : index
    %11 = vector.load %arg2[%c0_3, %c0_4, %c0_5] : memref<4x3x128xf32, #tpu.memory_space<vmem>>, vector<1x3x128xf32>
    %12 = vector.shape_cast %11 : vector<1x3x128xf32> to vector<3x128xf32>
    %cst = arith.constant dense<0.000000e+00> : vector<32x128xf32>
    %13 = tpu.matmul %3, %12, %cst {dimension_numbers = #tpu.dot_dimension_numbers<[1], [0], [0], [1], [0, 0, 1, 1], [], []>} : vector<32x3xf32>, vector<3x128xf32>, vector<32x128xf32> -> vector<32x128xf32>
    %14 = vector.broadcast %5 : vector<32x1xf32> to vector<32x128xf32>
    %15 = arith.addf %13, %14 : vector<32x128xf32>
    %c0_6 = arith.constant 0 : index
    %c0_7 = arith.constant 0 : index
    %c0_8 = arith.constant 0 : index
    %16 = vector.load %arg5[%c0_6, %c0_7, %c0_8] : memref<4x32x128xf32, #tpu.memory_space<vmem>>, vector<1x32x128xf32>
    %17 = vector.shape_cast %16 : vector<1x32x128xf32> to vector<32x128xf32>
    %18 = vector.shape_cast %15 : vector<32x128xf32> to vector<1x32x128xf32>
    tpu.vector_store %arg5[%c0_6, %c0_7, %c0_8], %18 {strides = array<i32>} : memref<4x32x128xf32, #tpu.memory_space<vmem>>, vector<1x32x128xf32>,
    %c1 = arith.constant 1 : index
    %c0_9 = arith.constant 0 : index
    %c0_10 = arith.constant 0 : index
    %19 = vector.load %arg2[%c1, %c0_9, %c0_10] : memref<4x3x128xf32, #tpu.memory_space<vmem>>, vector<1x3x128xf32>
    %20 = vector.shape_cast %19 : vector<1x3x128xf32> to vector<3x128xf32>
    %cst_11 = arith.constant dense<0.000000e+00> : vector<32x128xf32>
    %21 = tpu.matmul %3, %20, %cst_11 {dimension_numbers = #tpu.dot_dimension_numbers<[1], [0], [0], [1], [0, 0, 1, 1], [], []>} : vector<32x3xf32>, vector<3x128xf32>, vector<32x128xf32> -> vector<32x128xf32>
    %22 = vector.broadcast %5 : vector<32x1xf32> to vector<32x128xf32>
    %23 = arith.addf %21, %22 : vector<32x128xf32>
    %c1_12 = arith.constant 1 : index
    %c0_13 = arith.constant 0 : index
    %c0_14 = arith.constant 0 : index
    %24 = vector.load %arg5[%c1_12, %c0_13, %c0_14] : memref<4x32x128xf32, #tpu.memory_space<vmem>>, vector<1x32x128xf32>
    %25 = vector.shape_cast %24 : vector<1x32x128xf32> to vector<32x128xf32>
    %26 = vector.shape_cast %23 : vector<32x128xf32> to vector<1x32x128xf32>
    tpu.vector_store %arg5[%c1_12, %c0_13, %c0_14], %26 {strides = array<i32>} : memref<4x32x128xf32, #tpu.memory_space<vmem>>, vector<1x32x128xf32>,
    %c2 = arith.constant 2 : index
    %c0_15 = arith.constant 0 : index
    %c0_16 = arith.constant 0 : index
    %27 = vector.load %arg2[%c2, %c0_15, %c0_16] : memref<4x3x128xf32, #tpu.memory_space<vmem>>, vector<1x3x128xf32>
    %28 = vector.shape_cast %27 : vector<1x3x128xf32> to vector<3x128xf32>
    %cst_17 = arith.constant dense<0.000000e+00> : vector<32x128xf32>
    %29 = tpu.matmul %3, %28, %cst_17 {dimension_numbers = #tpu.dot_dimension_numbers<[1], [0], [0], [1], [0, 0, 1, 1], [], []>} : vector<32x3xf32>, vector<3x128xf32>, vector<32x128xf32> -> vector<32x128xf32>
    %30 = vector.broadcast %5 : vector<32x1xf32> to vector<32x128xf32>
    %31 = arith.addf %29, %30 : vector<32x128xf32>
    %c2_18 = arith.constant 2 : index
    %c0_19 = arith.constant 0 : index
    %c0_20 = arith.constant 0 : index
    %32 = vector.load %arg5[%c2_18, %c0_19, %c0_20] : memref<4x32x128xf32, #tpu.memory_space<vmem>>, vector<1x32x128xf32>
    %33 = vector.shape_cast %32 : vector<1x32x128xf32> to vector<32x128xf32>
    %34 = vector.shape_cast %31 : vector<32x128xf32> to vector<1x32x128xf32>
    tpu.vector_store %arg5[%c2_18, %c0_19, %c0_20], %34 {strides = array<i32>} : memref<4x32x128xf32, #tpu.memory_space<vmem>>, vector<1x32x128xf32>,
    %c3 = arith.constant 3 : index
    %c0_21 = arith.constant 0 : index
    %c0_22 = arith.constant 0 : index
    %35 = vector.load %arg2[%c3, %c0_21, %c0_22] : memref<4x3x128xf32, #tpu.memory_space<vmem>>, vector<1x3x128xf32>
    %36 = vector.shape_cast %35 : vector<1x3x128xf32> to vector<3x128xf32>
    %cst_23 = arith.constant dense<0.000000e+00> : vector<32x128xf32>
    %37 = tpu.matmul %3, %36, %cst_23 {dimension_numbers = #tpu.dot_dimension_numbers<[1], [0], [0], [1], [0, 0, 1, 1], [], []>} : vector<32x3xf32>, vector<3x128xf32>, vector<32x128xf32> -> vector<32x128xf32>
    %38 = vector.broadcast %5 : vector<32x1xf32> to vector<32x128xf32>
    %39 = arith.addf %37, %38 : vector<32x128xf32>
    %c3_24 = arith.constant 3 : index
    %c0_25 = arith.constant 0 : index
    %c0_26 = arith.constant 0 : index
    %40 = vector.load %arg5[%c3_24, %c0_25, %c0_26] : memref<4x32x128xf32, #tpu.memory_space<vmem>>, vector<1x32x128xf32>
    %41 = vector.shape_cast %40 : vector<1x32x128xf32> to vector<32x128xf32>
    %42 = vector.shape_cast %39 : vector<32x128xf32> to vector<1x32x128xf32>
    tpu.vector_store %arg5[%c3_24, %c0_25, %c0_26], %42 {strides = array<i32>} : memref<4x32x128xf32, #tpu.memory_space<vmem>>, vector<1x32x128xf32>,
    %c0_27 = arith.constant 0 : index
    %c0_28 = arith.constant 0 : index
    %c0_29 = arith.constant 0 : index
    %43 = vector.load %arg5[%c0_27, %c0_28, %c0_29] : memref<4x32x128xf32, #tpu.memory_space<vmem>>, vector<1x32x128xf32>
    %44 = vector.shape_cast %43 : vector<1x32x128xf32> to vector<32x128xf32>
    %45 = vector.broadcast %4 : vector<32x1xf32> to vector<32x128xf32>
    %46 = vector.broadcast %10 : vector<1x128xf32> to vector<32x128xf32>
    %47 = arith.mulf %45, %46 : vector<32x128xf32>
    %48 = arith.addf %44, %47 : vector<32x128xf32>
    %cst_30 = arith.constant dense<0.000000e+00> : vector<32x128xf32>
    %49 = tpu.matmul %1, %48, %cst_30 {dimension_numbers = #tpu.dot_dimension_numbers<[1], [0], [0], [1], [0, 0, 1, 1], [], []>} : vector<32x32xf32>, vector<32x128xf32>, vector<32x128xf32> -> vector<32x128xf32>
    %50 = vector.broadcast %6 : vector<32x1xf32> to vector<32x128xf32>
    %51 = arith.addf %49, %50 : vector<32x128xf32>
    %52 = arith.negf %51 : vector<32x128xf32>
    %53 = math.exp %52 : vector<32x128xf32>
    %cst_31 = arith.constant 1.000000e+00 : f32
    %54 = vector.broadcast %cst_31 : f32 to vector<32x128xf32>
    %55 = arith.addf %54, %53 : vector<32x128xf32>
    %56 = arith.divf %54, %55 : vector<32x128xf32>
    %cst_32 = arith.constant dense<0.000000e+00> : vector<32x128xf32>
    %57 = tpu.matmul %2, %56, %cst_32 {dimension_numbers = #tpu.dot_dimension_numbers<[1], [0], [0], [1], [0, 0, 1, 1], [], []>} : vector<32x32xf32>, vector<32x128xf32>, vector<32x128xf32> -> vector<32x128xf32>
    %58 = vector.broadcast %7 : vector<32x1xf32> to vector<32x128xf32>
    %59 = arith.addf %57, %58 : vector<32x128xf32>
    %60 = arith.negf %59 : vector<32x128xf32>
    %61 = math.exp %60 : vector<32x128xf32>
    %cst_33 = arith.constant 1.000000e+00 : f32
    %62 = vector.broadcast %cst_33 : f32 to vector<32x128xf32>
    %63 = arith.addf %62, %61 : vector<32x128xf32>
    %64 = arith.divf %62, %63 : vector<32x128xf32>
    %65 = vector.broadcast %8 : vector<32x1xf32> to vector<32x128xf32>
    %66 = arith.mulf %64, %65 : vector<32x128xf32>
    %cst_34 = arith.constant dense<0.000000e+00> : vector<128xf32>
    %67 = vector.multi_reduction <add>, %66, %cst_34 [0] : vector<32x128xf32> to vector<128xf32>
    %68 = vector.shape_cast %67 : vector<128xf32> to vector<1x128xf32>
    %69 = vector.broadcast %9 : vector<1x1xf32> to vector<1x128xf32>
    %70 = arith.addf %68, %69 : vector<1x128xf32>
    %c0_35 = arith.constant 0 : index
    %c0_36 = arith.constant 0 : index
    %71 = vector.load %arg4[%c0_35, %c0_36] : memref<4x128xf32, #tpu.memory_space<vmem>>, vector<1x128xf32>
    tpu.vector_store %arg4[%c0_35, %c0_36], %70 {strides = array<i32>} : memref<4x128xf32, #tpu.memory_space<vmem>>, vector<1x128xf32>,
    %c1_37 = arith.constant 1 : index
    %c0_38 = arith.constant 0 : index
    %c0_39 = arith.constant 0 : index
    %72 = vector.load %arg5[%c1_37, %c0_38, %c0_39] : memref<4x32x128xf32, #tpu.memory_space<vmem>>, vector<1x32x128xf32>
    %73 = vector.shape_cast %72 : vector<1x32x128xf32> to vector<32x128xf32>
    %74 = vector.broadcast %4 : vector<32x1xf32> to vector<32x128xf32>
    %75 = vector.broadcast %70 : vector<1x128xf32> to vector<32x128xf32>
    %76 = arith.mulf %74, %75 : vector<32x128xf32>
    %77 = arith.addf %73, %76 : vector<32x128xf32>
    %cst_40 = arith.constant dense<0.000000e+00> : vector<32x128xf32>
    %78 = tpu.matmul %1, %77, %cst_40 {dimension_numbers = #tpu.dot_dimension_numbers<[1], [0], [0], [1], [0, 0, 1, 1], [], []>} : vector<32x32xf32>, vector<32x128xf32>, vector<32x128xf32> -> vector<32x128xf32>
    %79 = vector.broadcast %6 : vector<32x1xf32> to vector<32x128xf32>
    %80 = arith.addf %78, %79 : vector<32x128xf32>
    %81 = arith.negf %80 : vector<32x128xf32>
    %82 = math.exp %81 : vector<32x128xf32>
    %cst_41 = arith.constant 1.000000e+00 : f32
    %83 = vector.broadcast %cst_41 : f32 to vector<32x128xf32>
    %84 = arith.addf %83, %82 : vector<32x128xf32>
    %85 = arith.divf %83, %84 : vector<32x128xf32>
    %cst_42 = arith.constant dense<0.000000e+00> : vector<32x128xf32>
    %86 = tpu.matmul %2, %85, %cst_42 {dimension_numbers = #tpu.dot_dimension_numbers<[1], [0], [0], [1], [0, 0, 1, 1], [], []>} : vector<32x32xf32>, vector<32x128xf32>, vector<32x128xf32> -> vector<32x128xf32>
    %87 = vector.broadcast %7 : vector<32x1xf32> to vector<32x128xf32>
    %88 = arith.addf %86, %87 : vector<32x128xf32>
    %89 = arith.negf %88 : vector<32x128xf32>
    %90 = math.exp %89 : vector<32x128xf32>
    %cst_43 = arith.constant 1.000000e+00 : f32
    %91 = vector.broadcast %cst_43 : f32 to vector<32x128xf32>
    %92 = arith.addf %91, %90 : vector<32x128xf32>
    %93 = arith.divf %91, %92 : vector<32x128xf32>
    %94 = vector.broadcast %8 : vector<32x1xf32> to vector<32x128xf32>
    %95 = arith.mulf %93, %94 : vector<32x128xf32>
    %cst_44 = arith.constant dense<0.000000e+00> : vector<128xf32>
    %96 = vector.multi_reduction <add>, %95, %cst_44 [0] : vector<32x128xf32> to vector<128xf32>
    %97 = vector.shape_cast %96 : vector<128xf32> to vector<1x128xf32>
    %98 = vector.broadcast %9 : vector<1x1xf32> to vector<1x128xf32>
    %99 = arith.addf %97, %98 : vector<1x128xf32>
    %c1_45 = arith.constant 1 : index
    %c0_46 = arith.constant 0 : index
    %100 = vector.load %arg4[%c1_45, %c0_46] : memref<4x128xf32, #tpu.memory_space<vmem>>, vector<1x128xf32>
    tpu.vector_store %arg4[%c1_45, %c0_46], %99 {strides = array<i32>} : memref<4x128xf32, #tpu.memory_space<vmem>>, vector<1x128xf32>,
    %c2_47 = arith.constant 2 : index
    %c0_48 = arith.constant 0 : index
    %c0_49 = arith.constant 0 : index
    %101 = vector.load %arg5[%c2_47, %c0_48, %c0_49] : memref<4x32x128xf32, #tpu.memory_space<vmem>>, vector<1x32x128xf32>
    %102 = vector.shape_cast %101 : vector<1x32x128xf32> to vector<32x128xf32>
    %103 = vector.broadcast %4 : vector<32x1xf32> to vector<32x128xf32>
    %104 = vector.broadcast %99 : vector<1x128xf32> to vector<32x128xf32>
    %105 = arith.mulf %103, %104 : vector<32x128xf32>
    %106 = arith.addf %102, %105 : vector<32x128xf32>
    %cst_50 = arith.constant dense<0.000000e+00> : vector<32x128xf32>
    %107 = tpu.matmul %1, %106, %cst_50 {dimension_numbers = #tpu.dot_dimension_numbers<[1], [0], [0], [1], [0, 0, 1, 1], [], []>} : vector<32x32xf32>, vector<32x128xf32>, vector<32x128xf32> -> vector<32x128xf32>
    %108 = vector.broadcast %6 : vector<32x1xf32> to vector<32x128xf32>
    %109 = arith.addf %107, %108 : vector<32x128xf32>
    %110 = arith.negf %109 : vector<32x128xf32>
    %111 = math.exp %110 : vector<32x128xf32>
    %cst_51 = arith.constant 1.000000e+00 : f32
    %112 = vector.broadcast %cst_51 : f32 to vector<32x128xf32>
    %113 = arith.addf %112, %111 : vector<32x128xf32>
    %114 = arith.divf %112, %113 : vector<32x128xf32>
    %cst_52 = arith.constant dense<0.000000e+00> : vector<32x128xf32>
    %115 = tpu.matmul %2, %114, %cst_52 {dimension_numbers = #tpu.dot_dimension_numbers<[1], [0], [0], [1], [0, 0, 1, 1], [], []>} : vector<32x32xf32>, vector<32x128xf32>, vector<32x128xf32> -> vector<32x128xf32>
    %116 = vector.broadcast %7 : vector<32x1xf32> to vector<32x128xf32>
    %117 = arith.addf %115, %116 : vector<32x128xf32>
    %118 = arith.negf %117 : vector<32x128xf32>
    %119 = math.exp %118 : vector<32x128xf32>
    %cst_53 = arith.constant 1.000000e+00 : f32
    %120 = vector.broadcast %cst_53 : f32 to vector<32x128xf32>
    %121 = arith.addf %120, %119 : vector<32x128xf32>
    %122 = arith.divf %120, %121 : vector<32x128xf32>
    %123 = vector.broadcast %8 : vector<32x1xf32> to vector<32x128xf32>
    %124 = arith.mulf %122, %123 : vector<32x128xf32>
    %cst_54 = arith.constant dense<0.000000e+00> : vector<128xf32>
    %125 = vector.multi_reduction <add>, %124, %cst_54 [0] : vector<32x128xf32> to vector<128xf32>
    %126 = vector.shape_cast %125 : vector<128xf32> to vector<1x128xf32>
    %127 = vector.broadcast %9 : vector<1x1xf32> to vector<1x128xf32>
    %128 = arith.addf %126, %127 : vector<1x128xf32>
    %c2_55 = arith.constant 2 : index
    %c0_56 = arith.constant 0 : index
    %129 = vector.load %arg4[%c2_55, %c0_56] : memref<4x128xf32, #tpu.memory_space<vmem>>, vector<1x128xf32>
    tpu.vector_store %arg4[%c2_55, %c0_56], %128 {strides = array<i32>} : memref<4x128xf32, #tpu.memory_space<vmem>>, vector<1x128xf32>,
    %c3_57 = arith.constant 3 : index
    %c0_58 = arith.constant 0 : index
    %c0_59 = arith.constant 0 : index
    %130 = vector.load %arg5[%c3_57, %c0_58, %c0_59] : memref<4x32x128xf32, #tpu.memory_space<vmem>>, vector<1x32x128xf32>
    %131 = vector.shape_cast %130 : vector<1x32x128xf32> to vector<32x128xf32>
    %132 = vector.broadcast %4 : vector<32x1xf32> to vector<32x128xf32>
    %133 = vector.broadcast %128 : vector<1x128xf32> to vector<32x128xf32>
    %134 = arith.mulf %132, %133 : vector<32x128xf32>
    %135 = arith.addf %131, %134 : vector<32x128xf32>
    %cst_60 = arith.constant dense<0.000000e+00> : vector<32x128xf32>
    %136 = tpu.matmul %1, %135, %cst_60 {dimension_numbers = #tpu.dot_dimension_numbers<[1], [0], [0], [1], [0, 0, 1, 1], [], []>} : vector<32x32xf32>, vector<32x128xf32>, vector<32x128xf32> -> vector<32x128xf32>
    %137 = vector.broadcast %6 : vector<32x1xf32> to vector<32x128xf32>
    %138 = arith.addf %136, %137 : vector<32x128xf32>
    %139 = arith.negf %138 : vector<32x128xf32>
    %140 = math.exp %139 : vector<32x128xf32>
    %cst_61 = arith.constant 1.000000e+00 : f32
    %141 = vector.broadcast %cst_61 : f32 to vector<32x128xf32>
    %142 = arith.addf %141, %140 : vector<32x128xf32>
    %143 = arith.divf %141, %142 : vector<32x128xf32>
    %cst_62 = arith.constant dense<0.000000e+00> : vector<32x128xf32>
    %144 = tpu.matmul %2, %143, %cst_62 {dimension_numbers = #tpu.dot_dimension_numbers<[1], [0], [0], [1], [0, 0, 1, 1], [], []>} : vector<32x32xf32>, vector<32x128xf32>, vector<32x128xf32> -> vector<32x128xf32>
    %145 = vector.broadcast %7 : vector<32x1xf32> to vector<32x128xf32>
    %146 = arith.addf %144, %145 : vector<32x128xf32>
    %147 = arith.negf %146 : vector<32x128xf32>
    %148 = math.exp %147 : vector<32x128xf32>
    %cst_63 = arith.constant 1.000000e+00 : f32
    %149 = vector.broadcast %cst_63 : f32 to vector<32x128xf32>
    %150 = arith.addf %149, %148 : vector<32x128xf32>
    %151 = arith.divf %149, %150 : vector<32x128xf32>
    %152 = vector.broadcast %8 : vector<32x1xf32> to vector<32x128xf32>
    %153 = arith.mulf %151, %152 : vector<32x128xf32>
    %cst_64 = arith.constant dense<0.000000e+00> : vector<128xf32>
    %154 = vector.multi_reduction <add>, %153, %cst_64 [0] : vector<32x128xf32> to vector<128xf32>
    %155 = vector.shape_cast %154 : vector<128xf32> to vector<1x128xf32>
    %156 = vector.broadcast %9 : vector<1x1xf32> to vector<1x128xf32>
    %157 = arith.addf %155, %156 : vector<1x128xf32>
    %c3_65 = arith.constant 3 : index
    %c0_66 = arith.constant 0 : index
    %158 = vector.load %arg4[%c3_65, %c0_66] : memref<4x128xf32, #tpu.memory_space<vmem>>, vector<1x128xf32>
    tpu.vector_store %arg4[%c3_65, %c0_66], %157 {strides = array<i32>} : memref<4x128xf32, #tpu.memory_space<vmem>>, vector<1x128xf32>,
    return
  }
  func.func @transform_0(%arg0: i32) -> (i32, i32) {
    %c0_i32 = arith.constant 0 : i32
    %c0_i32_0 = arith.constant 0 : i32
    return %c0_i32, %arg0 : i32, i32
  }
  func.func @transform_1(%arg0: i32) -> (i32, i32, i32) {
    %c0_i32 = arith.constant 0 : i32
    %c0_i32_0 = arith.constant 0 : i32
    %c0_i32_1 = arith.constant 0 : i32
    return %c0_i32, %c0_i32_0, %arg0 : i32, i32, i32
  }
  func.func @transform_2(%arg0: i32) -> (i32, i32) {
    %c0_i32 = arith.constant 0 : i32
    %c0_i32_0 = arith.constant 0 : i32
    %c0_i32_1 = arith.constant 0 : i32
    return %c0_i32, %c0_i32_0 : i32, i32
  }
  func.func @transform_3(%arg0: i32) -> (i32, i32) {
    %c0_i32 = arith.constant 0 : i32
    %c0_i32_0 = arith.constant 0 : i32
    return %c0_i32, %arg0 : i32, i32
  }
}

</mosaic_0001>

<llo_original>
// kernel: tpu_custom_call.1
$region0: #{tpu_custom_call.1}
  #allocation0 [shape = 'u32[]', space=smem, size = 0x4, offset = 0x4, fixed_abs, tag = 'smem constant byte address 0x4 - core index']
  #allocation1 [shape = 'u32[72,128]{1,0:T(1,128)}', space=vmem, size = 0x9000, scoped, tag = 'internal scratch']
  #allocation2 [shape = 'f32[4,32,128]{2,1,0:T(8,128)}', space=vmem, size = 0x10000, scoped, tag = 'scratch operand']
  %s0 = inlined_call_operand.vmem [shape: f32[1,128], index: 0, kind: input, shape index: {}]
  %s1 = inlined_call_operand.vmem [shape: f32[4,3,128], index: 1, kind: input, shape index: {}]
  %s2 = inlined_call_operand.hbm [shape: f32[32,73], index: 2, kind: input, shape index: {}]
  %s3 = inlined_call_operand.hbm [shape: f32[4,128], index: 3, kind: output, shape index: {}]
  %s4 = sld [smem:[#allocation0]]
  $region26: #{tpu_custom_call.1} parent=0
    _
  %s6 = ssub.s32 1, %s4
  %s7 = scalar_select 0, %s6, %s4
  $region1: #{tpu_custom_call.1} parent=0
    #allocation3 [shape = 'u8[16384]{0}', space=vmem, size = 0x4000, scoped, tag = 'input window, operand 2, single buffered']
    #allocation4 [shape = 's32[1]{0}', space=sflag, size = 0x4, scoped, tag = 'scoped memory for tpu_custom_call.1']
    #allocation5 [shape = 's32[1]{0}', space=sflag, size = 0x4, scoped, tag = 'scoped memory for tpu_custom_call.1']
    #allocation6 [shape = 'u8[2048]{0}', space=vmem, size = 0x800, scoped, tag = 'output window, operand 0, single buffered']
    %8 = vsyncpa [#allocation4], 0
    %9 = vsyncpa [#allocation5], 0
    // Predicated region
    $region2: #{tpu_custom_call.1} parent=1 // pred_check
      _
    $region3: #{tpu_custom_call.1} parent=1 // pred_check_branch
      %11 = sbr.rel (0) target = $region5
    $region4: #{tpu_custom_call.1} parent=1 // pred_region
      _
    $region5: #{tpu_custom_call.1} parent=1 // pred_fallthru
      _
    // Predicated region
    $region6: #{tpu_custom_call.1} parent=1 // pred_check
      _
    $region7: #{tpu_custom_call.1} parent=1 // pred_check_branch
      %13 = sbr.rel (0) target = $region9
    $region8: #{tpu_custom_call.1} parent=1 // pred_region
      _
    $region9: #{tpu_custom_call.1} parent=1 // pred_fallthru
      _
    // Predicated region
    $region10: #{tpu_custom_call.1} parent=1 // pred_check
      _
    $region11: #{tpu_custom_call.1} parent=1 // pred_check_branch
      %15 = sbr.rel (0) target = $region13
    $region12: #{tpu_custom_call.1} parent=1 // pred_region
      %17 = vsyncadd [#allocation4], 0
      %s18 = sshll.u32 %s2, 4
      %s19 = int_to_ptr.hbm [resolvable:$true] %s18
      %s20 = sshll.u32 [#allocation3], 4
      %s21 = int_to_ptr.vmem [resolvable:$true] %s20
      %26 = dma.hbm_to_vmem [thread:$0]  %s19, 512, %s21, [#allocation4], 128, 128, 8
    $region13: #{tpu_custom_call.1} parent=1 // pred_fallthru
      _
    // Predicated region
    $region14: #{tpu_custom_call.1} parent=1 // pred_check
      _
    $region15: #{tpu_custom_call.1} parent=1 // pred_check_branch
      %28 = sbr.rel (0) target = $region17
    $region16: #{tpu_custom_call.1} parent=1 // pred_region
      %30 = dma.done [#allocation4], 512
    $region17: #{tpu_custom_call.1} parent=1 // pred_fallthru
      _
    %v31 = vld [vmem:[#allocation3] sm:$0xff]
    %v32 = vld [vmem:[#allocation3 + $0x8] sm:$0xff]
    %v33 = vld [vmem:[#allocation3 + $0x10] sm:$0xff]
    %v34 = vld [vmem:[#allocation3 + $0x18] sm:$0xff]
    %v35 = vld [vmem:[%s0] sm:$0x1]
    %v36 = vld [vmem:[%s1] sm:$0x7]
    %38 = vset.pattern.permute.xlu0 68
    %39 = vperm.xlu0 %38, %v31
    %v40 = vpop.permute.xlu0 %39
    %43 = vset.pattern.permute.xlu0 68
    %44 = vperm.xlu0 %43, %v32
    %v45 = vpop.permute.xlu0 %44
    %48 = vset.pattern.permute.xlu0 68
    %49 = vperm.xlu0 %48, %v33
    %v50 = vpop.permute.xlu0 %49
    %53 = vset.pattern.permute.xlu0 68
    %54 = vperm.xlu0 %53, %v34
    %v55 = vpop.permute.xlu0 %54
    %57 = vrot.lane.b32.xlu0 %v31, 64
    %v58 = vpop.permute.xlu0 %57
    %59 = vrot.lane.b32.xlu0 %v32, 64
    %v60 = vpop.permute.xlu0 %59
    %61 = vrot.lane.b32.xlu0 %v33, 64
    %v62 = vpop.permute.xlu0 %61
    %63 = vrot.lane.b32.xlu0 %v34, 64
    %v64 = vpop.permute.xlu0 %63
    %vm65 = vcmask 23552
    %v66 = vsel %vm65, %v58, 0
    %v68 = vsel %vm65, %v60, 0
    %v70 = vsel %vm65, %v62, 0
    %v72 = vsel %vm65, %v64, 0
    %vm74 = vcmask 1042432
    %v76 = vsel %vm74, %v36, 0
    %78 = vmatpush.msra.mxu0 0.0
    %79 = vmatpush.msra.mxu0 0.0
    %80 = vmatpush.msra.mxu0 0.0
    %81 = vmatpush.msra.mxu0 0.0
    %82 = vmatpush.msra.mxu0 0.0
    %83 = vmatpush.msra.mxu0 0.0
    %84 = vmatpush.msra.mxu0 0.0
    %85 = vmatpush.msra.mxu0 0.0
    %86 = vmatpush.msra.mxu0 0.0
    %87 = vmatpush.msra.mxu0 0.0
    %88 = vmatpush.msra.mxu0 0.0
    %89 = vmatpush.msra.mxu0 0.0
    %90 = vmatpush.msra.mxu0 0.0
    %91 = vmatpush.msra.mxu0 0.0
    %92 = vmatpush.msra.mxu0 0.0
    %93 = vmatpush.msra.mxu0 %v76
    %94 = vmatmul.f32.gmra.mxu0 %v66
    %v95 = vpop.f32.mrf.mxu0
    %v96 = vadd.f32 %v40, %v95
    %97 = vmatmul.f32.gmra.mxu0 %v68
    %v98 = vpop.f32.mrf.mxu0
    %v99 = vadd.f32 %v45, %v98
    %100 = vmatmul.f32.gmra.mxu0 %v70
    %v101 = vpop.f32.mrf.mxu0
    %v102 = vadd.f32 %v50, %v101
    %103 = vmatmul.f32.gmra.mxu0 %v72
    %v104 = vpop.f32.mrf.mxu0
    %v105 = vadd.f32 %v55, %v104
    %106 = vdwg.mxu0
    %107 = vst [vmem:[#allocation2] sm:$0xff] %v96
    %108 = vst [vmem:[#allocation2 + $0x8] sm:$0xff] %v99
    %109 = vst [vmem:[#allocation2 + $0x10] sm:$0xff] %v102
    %110 = vst [vmem:[#allocation2 + $0x18] sm:$0xff] %v105
    %s111 = scalar_lea.vmem %s1, 4
    %v112 = vld [vmem:[%s111] sm:$0x7]
    %v114 = vsel %vm74, %v112, 0
    %116 = vmatpush.msra.mxu0 0.0
    %117 = vmatpush.msra.mxu0 0.0
    %118 = vmatpush.msra.mxu0 0.0
    %119 = vmatpush.msra.mxu0 0.0
    %120 = vmatpush.msra.mxu0 0.0
    %121 = vmatpush.msra.mxu0 0.0
    %122 = vmatpush.msra.mxu0 0.0
    %123 = vmatpush.msra.mxu0 0.0
    %124 = vmatpush.msra.mxu0 0.0
    %125 = vmatpush.msra.mxu0 0.0
    %126 = vmatpush.msra.mxu0 0.0
    %127 = vmatpush.msra.mxu0 0.0
    %128 = vmatpush.msra.mxu0 0.0
    %129 = vmatpush.msra.mxu0 0.0
    %130 = vmatpush.msra.mxu0 0.0
    %131 = vmatpush.msra.mxu0 %v114
    %132 = vmatmul.f32.gmra.mxu0 %v66
    %v133 = vpop.f32.mrf.mxu0
    %v134 = vadd.f32 %v40, %v133
    %135 = vmatmul.f32.gmra.mxu0 %v68
    %v136 = vpop.f32.mrf.mxu0
    %v137 = vadd.f32 %v45, %v136
    %138 = vmatmul.f32.gmra.mxu0 %v70
    %v139 = vpop.f32.mrf.mxu0
    %v140 = vadd.f32 %v50, %v139
    %141 = vmatmul.f32.gmra.mxu0 %v72
    %v142 = vpop.f32.mrf.mxu0
    %v143 = vadd.f32 %v55, %v142
    %144 = vdwg.mxu0
    %s145 = scalar_lea.vmem [#allocation2], 32
    %146 = vst [vmem:[%s145] sm:$0xff] %v134
    %147 = vst [vmem:[%s145 + $0x8] sm:$0xff] %v137
    %148 = vst [vmem:[%s145 + $0x10] sm:$0xff] %v140
    %149 = vst [vmem:[%s145 + $0x18] sm:$0xff] %v143
    %s150 = scalar_lea.vmem %s1, 8
    %v151 = vld [vmem:[%s150] sm:$0x7]
    %v153 = vsel %vm74, %v151, 0
    %155 = vmatpush.msra.mxu0 0.0
    %156 = vmatpush.msra.mxu0 0.0
    %157 = vmatpush.msra.mxu0 0.0
    %158 = vmatpush.msra.mxu0 0.0
    %159 = vmatpush.msra.mxu0 0.0
    %160 = vmatpush.msra.mxu0 0.0
    %161 = vmatpush.msra.mxu0 0.0
    %162 = vmatpush.msra.mxu0 0.0
    %163 = vmatpush.msra.mxu0 0.0
    %164 = vmatpush.msra.mxu0 0.0
    %165 = vmatpush.msra.mxu0 0.0
    %166 = vmatpush.msra.mxu0 0.0
    %167 = vmatpush.msra.mxu0 0.0
    %168 = vmatpush.msra.mxu0 0.0
    %169 = vmatpush.msra.mxu0 0.0
    %170 = vmatpush.msra.mxu0 %v153
    %171 = vmatmul.f32.gmra.mxu0 %v66
    %v172 = vpop.f32.mrf.mxu0
    %v173 = vadd.f32 %v40, %v172
    %174 = vmatmul.f32.gmra.mxu0 %v68
    %v175 = vpop.f32.mrf.mxu0
    %v176 = vadd.f32 %v45, %v175
    %177 = vmatmul.f32.gmra.mxu0 %v70
    %v178 = vpop.f32.mrf.mxu0
    %v179 = vadd.f32 %v50, %v178
    %180 = vmatmul.f32.gmra.mxu0 %v72
    %v181 = vpop.f32.mrf.mxu0
    %v182 = vadd.f32 %v55, %v181
    %183 = vdwg.mxu0
    %s184 = scalar_lea.vmem [#allocation2], 64
    %185 = vst [vmem:[%s184] sm:$0xff] %v173
    %186 = vst [vmem:[%s184 + $0x8] sm:$0xff] %v176
    %187 = vst [vmem:[%s184 + $0x10] sm:$0xff] %v179
    %188 = vst [vmem:[%s184 + $0x18] sm:$0xff] %v182
    %s189 = scalar_lea.vmem %s1, 12
    %v190 = vld [vmem:[%s189] sm:$0x7]
    %v192 = vsel %vm74, %v190, 0
    %194 = vmatpush.msra.mxu0 0.0
    %195 = vmatpush.msra.mxu0 0.0
    %196 = vmatpush.msra.mxu0 0.0
    %197 = vmatpush.msra.mxu0 0.0
    %198 = vmatpush.msra.mxu0 0.0
    %199 = vmatpush.msra.mxu0 0.0
    %200 = vmatpush.msra.mxu0 0.0
    %201 = vmatpush.msra.mxu0 0.0
    %202 = vmatpush.msra.mxu0 0.0
    %203 = vmatpush.msra.mxu0 0.0
    %204 = vmatpush.msra.mxu0 0.0
    %205 = vmatpush.msra.mxu0 0.0
    %206 = vmatpush.msra.mxu0 0.0
    %207 = vmatpush.msra.mxu0 0.0
    %208 = vmatpush.msra.mxu0 0.0
    %209 = vmatpush.msra.mxu0 %v192
    %210 = vmatmul.f32.gmra.mxu0 %v66
    %v211 = vpop.f32.mrf.mxu0
    %v212 = vadd.f32 %v40, %v211
    %213 = vmatmul.f32.gmra.mxu0 %v68
    %v214 = vpop.f32.mrf.mxu0
    %v215 = vadd.f32 %v45, %v214
    %216 = vmatmul.f32.gmra.mxu0 %v70
    %v217 = vpop.f32.mrf.mxu0
    %v218 = vadd.f32 %v50, %v217
    %219 = vmatmul.f32.gmra.mxu0 %v72
    %v220 = vpop.f32.mrf.mxu0
    %v221 = vadd.f32 %v55, %v220
    %222 = vdwg.mxu0
    %s223 = scalar_lea.vmem [#allocation2], 96
    %224 = vst [vmem:[%s223] sm:$0xff] %v212
    %225 = vst [vmem:[%s223 + $0x8] sm:$0xff] %v215
    %226 = vst [vmem:[%s223 + $0x10] sm:$0xff] %v218
    %227 = vst [vmem:[%s223 + $0x18] sm:$0xff] %v221
    %v228 = vld [vmem:[#allocation2] sm:$0xff]
    %v229 = vld [vmem:[#allocation2 + $0x8] sm:$0xff]
    %v230 = vld [vmem:[#allocation2 + $0x10] sm:$0xff]
    %v231 = vld [vmem:[#allocation2 + $0x18] sm:$0xff]
    %232 = vset.pattern.permute.xlu0 67
    %233 = vperm.xlu0 %232, %v31
    %v234 = vpop.permute.xlu0 %233
    %236 = vset.pattern.permute.xlu0 67
    %237 = vperm.xlu0 %236, %v32
    %v238 = vpop.permute.xlu0 %237
    %240 = vset.pattern.permute.xlu0 67
    %241 = vperm.xlu0 %240, %v33
    %v242 = vpop.permute.xlu0 %241
    %244 = vset.pattern.permute.xlu0 67
    %245 = vperm.xlu0 %244, %v34
    %v246 = vpop.permute.xlu0 %245
    %v249 = vperm.slane %v35, 0
    %v251 = vmul.f32 %v234, %v249
    %v252 = vmul.f32 %v238, %v249
    %v253 = vmul.f32 %v242, %v249
    %v254 = vmul.f32 %v246, %v249
    %v255 = vadd.f32 %v228, %v251
    %v256 = vadd.f32 %v229, %v252
    %v257 = vadd.f32 %v230, %v253
    %v258 = vadd.f32 %v231, %v254
    %259 = vset.pattern.permute.xlu0 69
    %260 = vperm.xlu0 %259, %v31
    %v261 = vpop.permute.xlu0 %260
    %263 = vset.pattern.permute.xlu0 69
    %264 = vperm.xlu0 %263, %v32
    %v265 = vpop.permute.xlu0 %264
    %267 = vset.pattern.permute.xlu0 69
    %268 = vperm.xlu0 %267, %v33
    %v269 = vpop.permute.xlu0 %268
    %271 = vset.pattern.permute.xlu0 69
    %272 = vperm.xlu0 %271, %v34
    %v273 = vpop.permute.xlu0 %272
    %vm275 = vcmask 261120
    %v276 = vsel %vm275, %v31, 0
    %v278 = vsel %vm275, %v32, 0
    %v280 = vsel %vm275, %v33, 0
    %v282 = vsel %vm275, %v34, 0
    %284 = vmatpush.msra.mxu0 0.0
    %285 = vmatpush.msra.mxu0 0.0
    %286 = vmatpush.msra.mxu0 0.0
    %287 = vmatpush.msra.mxu0 0.0
    %288 = vmatpush.msra.mxu0 0.0
    %289 = vmatpush.msra.mxu0 0.0
    %290 = vmatpush.msra.mxu0 0.0
    %291 = vmatpush.msra.mxu0 0.0
    %292 = vmatpush.msra.mxu0 0.0
    %293 = vmatpush.msra.mxu0 0.0
    %294 = vmatpush.msra.mxu0 0.0
    %295 = vmatpush.msra.mxu0 0.0
    %296 = vmatpush.msra.mxu0 %v258
    %297 = vmatpush.msra.mxu0 %v257
    %298 = vmatpush.msra.mxu0 %v256
    %299 = vmatpush.msra.mxu0 %v255
    %300 = vmatmul.f32.gmra.mxu0 %v276
    %v301 = vpop.f32.mrf.mxu0
    %v302 = vadd.f32 %v261, %v301
    %303 = vmatmul.f32.gmra.mxu0 %v278
    %v304 = vpop.f32.mrf.mxu0
    %v305 = vadd.f32 %v265, %v304
    %306 = vmatmul.f32.gmra.mxu0 %v280
    %v307 = vpop.f32.mrf.mxu0
    %v308 = vadd.f32 %v269, %v307
    %309 = vmatmul.f32.gmra.mxu0 %v282
    %v310 = vpop.f32.mrf.mxu0
    %v311 = vadd.f32 %v273, %v310
    %312 = vdwg.mxu0
    %v313 = vxor.u32 %v302, 2147483648
    %v314 = vxor.u32 %v305, 2147483648
    %v315 = vxor.u32 %v308, 2147483648
    %v316 = vxor.u32 %v311, 2147483648
    %v317 = vmul.f32 %v313, 1.442695
    %v318 = vpow.pop %v317
    %v319 = vmul.f32 %v314, 1.442695
    %v320 = vpow.pop %v319
    %v321 = vmul.f32 %v315, 1.442695
    %v322 = vpow.pop %v321
    %v323 = vmul.f32 %v316, 1.442695
    %v324 = vpow.pop %v323
    %v325 = vadd.f32 %v318, 1.0
    %v326 = vadd.f32 %v320, 1.0
    %v327 = vadd.f32 %v322, 1.0
    %v328 = vadd.f32 %v324, 1.0
    %v329 = vrcp.pop %v325
    %v330 = vmul.f32 %v325, %v329
    %v331 = vsub.f32 1.0, %v330
    %v332 = vmul.f32 %v329, %v331
    %v333 = vadd.f32 %v329, %v332
    %vm334 = vweird.f32 %v325
    %vm335 = vweird.f32 %v329
    %vm336 = vmor %vm334, %vm335
    %v337 = vsel %vm336, %v329, %v333
    %v338 = vand.u32 2147483647, %v325
    %vm339 = vcmp.eq.f32.partialorder %v338, 8.507059e+37
    %v340 = vand.u32 %v325, 2147483648
    %v341 = vor.u32 1.1754944e-38, %v340
    %v342 = vsel %vm339, %v341, %v337
    %v343 = vmul.f32 1.0, %v342
    %v344 = vrcp.pop %v326
    %v345 = vmul.f32 %v326, %v344
    %v346 = vsub.f32 1.0, %v345
    %v347 = vmul.f32 %v344, %v346
    %v348 = vadd.f32 %v344, %v347
    %vm349 = vweird.f32 %v326
    %vm350 = vweird.f32 %v344
    %vm351 = vmor %vm349, %vm350
    %v352 = vsel %vm351, %v344, %v348
    %v353 = vand.u32 2147483647, %v326
    %vm354 = vcmp.eq.f32.partialorder %v353, 8.507059e+37
    %v355 = vand.u32 %v326, 2147483648
    %v356 = vor.u32 1.1754944e-38, %v355
    %v357 = vsel %vm354, %v356, %v352
    %v358 = vmul.f32 1.0, %v357
    %v359 = vrcp.pop %v327
    %v360 = vmul.f32 %v327, %v359
    %v361 = vsub.f32 1.0, %v360
    %v362 = vmul.f32 %v359, %v361
    %v363 = vadd.f32 %v359, %v362
    %vm364 = vweird.f32 %v327
    %vm365 = vweird.f32 %v359
    %vm366 = vmor %vm364, %vm365
    %v367 = vsel %vm366, %v359, %v363
    %v368 = vand.u32 2147483647, %v327
    %vm369 = vcmp.eq.f32.partialorder %v368, 8.507059e+37
    %v370 = vand.u32 %v327, 2147483648
    %v371 = vor.u32 1.1754944e-38, %v370
    %v372 = vsel %vm369, %v371, %v367
    %v373 = vmul.f32 1.0, %v372
    %v374 = vrcp.pop %v328
    %v375 = vmul.f32 %v328, %v374
    %v376 = vsub.f32 1.0, %v375
    %v377 = vmul.f32 %v374, %v376
    %v378 = vadd.f32 %v374, %v377
    %vm379 = vweird.f32 %v328
    %vm380 = vweird.f32 %v374
    %vm381 = vmor %vm379, %vm380
    %v382 = vsel %vm381, %v374, %v378
    %v383 = vand.u32 2147483647, %v328
    %vm384 = vcmp.eq.f32.partialorder %v383, 8.507059e+37
    %v385 = vand.u32 %v328, 2147483648
    %v386 = vor.u32 1.1754944e-38, %v385
    %v387 = vsel %vm384, %v386, %v382
    %v388 = vmul.f32 1.0, %v387
    %389 = vset.pattern.permute.xlu0 70
    %390 = vperm.xlu0 %389, %v31
    %v391 = vpop.permute.xlu0 %390
    %393 = vset.pattern.permute.xlu0 70
    %394 = vperm.xlu0 %393, %v32
    %v395 = vpop.permute.xlu0 %394
    %397 = vset.pattern.permute.xlu0 70
    %398 = vperm.xlu0 %397, %v33
    %v399 = vpop.permute.xlu0 %398
    %401 = vset.pattern.permute.xlu0 70
    %402 = vperm.xlu0 %401, %v34
    %v403 = vpop.permute.xlu0 %402
    %405 = vrot.lane.b32.xlu0 %v31, 96
    %v406 = vpop.permute.xlu0 %405
    %407 = vrot.lane.b32.xlu0 %v32, 96
    %v408 = vpop.permute.xlu0 %407
    %409 = vrot.lane.b32.xlu0 %v33, 96
    %v410 = vpop.permute.xlu0 %409
    %411 = vrot.lane.b32.xlu0 %v34, 96
    %v412 = vpop.permute.xlu0 %411
    %v413 = vsel %vm275, %v406, 0
    %v415 = vsel %vm275, %v408, 0
    %v417 = vsel %vm275, %v410, 0
    %v419 = vsel %vm275, %v412, 0
    %421 = vmatpush.msra.mxu0 0.0
    %422 = vmatpush.msra.mxu0 0.0
    %423 = vmatpush.msra.mxu0 0.0
    %424 = vmatpush.msra.mxu0 0.0
    %425 = vmatpush.msra.mxu0 0.0
    %426 = vmatpush.msra.mxu0 0.0
    %427 = vmatpush.msra.mxu0 0.0
    %428 = vmatpush.msra.mxu0 0.0
    %429 = vmatpush.msra.mxu0 0.0
    %430 = vmatpush.msra.mxu0 0.0
    %431 = vmatpush.msra.mxu0 0.0
    %432 = vmatpush.msra.mxu0 0.0
    %433 = vmatpush.msra.mxu0 %v388
    %434 = vmatpush.msra.mxu0 %v373
    %435 = vmatpush.msra.mxu0 %v358
    %436 = vmatpush.msra.mxu0 %v343
    %437 = vmatmul.f32.gmra.mxu0 %v413
    %v438 = vpop.f32.mrf.mxu0
    %v439 = vadd.f32 %v391, %v438
    %440 = vmatmul.f32.gmra.mxu0 %v415
    %v441 = vpop.f32.mrf.mxu0
    %v442 = vadd.f32 %v395, %v441
    %443 = vmatmul.f32.gmra.mxu0 %v417
    %v444 = vpop.f32.mrf.mxu0
    %v445 = vadd.f32 %v399, %v444
    %446 = vmatmul.f32.gmra.mxu0 %v419
    %v447 = vpop.f32.mrf.mxu0
    %v448 = vadd.f32 %v403, %v447
    %449 = vdwg.mxu0
    %v450 = vxor.u32 %v439, 2147483648
    %v451 = vxor.u32 %v442, 2147483648
    %v452 = vxor.u32 %v445, 2147483648
    %v453 = vxor.u32 %v448, 2147483648
    %v454 = vmul.f32 %v450, 1.442695
    %v455 = vpow.pop %v454
    %v456 = vmul.f32 %v451, 1.442695
    %v457 = vpow.pop %v456
    %v458 = vmul.f32 %v452, 1.442695
    %v459 = vpow.pop %v458
    %v460 = vmul.f32 %v453, 1.442695
    %v461 = vpow.pop %v460
    %v462 = vadd.f32 %v455, 1.0
    %v463 = vadd.f32 %v457, 1.0
    %v464 = vadd.f32 %v459, 1.0
    %v465 = vadd.f32 %v461, 1.0
    %v466 = vrcp.pop %v462
    %v467 = vmul.f32 %v462, %v466
    %v468 = vsub.f32 1.0, %v467
    %v469 = vmul.f32 %v466, %v468
    %v470 = vadd.f32 %v466, %v469
    %vm471 = vweird.f32 %v462
    %vm472 = vweird.f32 %v466
    %vm473 = vmor %vm471, %vm472
    %v474 = vsel %vm473, %v466, %v470
    %v475 = vand.u32 2147483647, %v462
    %vm476 = vcmp.eq.f32.partialorder %v475, 8.507059e+37
    %v477 = vand.u32 %v462, 2147483648
    %v478 = vor.u32 1.1754944e-38, %v477
    %v479 = vsel %vm476, %v478, %v474
    %v480 = vmul.f32 1.0, %v479
    %v481 = vrcp.pop %v463
    %v482 = vmul.f32 %v463, %v481
    %v483 = vsub.f32 1.0, %v482
    %v484 = vmul.f32 %v481, %v483
    %v485 = vadd.f32 %v481, %v484
    %vm486 = vweird.f32 %v463
    %vm487 = vweird.f32 %v481
    %vm488 = vmor %vm486, %vm487
    %v489 = vsel %vm488, %v481, %v485
    %v490 = vand.u32 2147483647, %v463
    %vm491 = vcmp.eq.f32.partialorder %v490, 8.507059e+37
    %v492 = vand.u32 %v463, 2147483648
    %v493 = vor.u32 1.1754944e-38, %v492
    %v494 = vsel %vm491, %v493, %v489
    %v495 = vmul.f32 1.0, %v494
    %v496 = vrcp.pop %v464
    %v497 = vmul.f32 %v464, %v496
    %v498 = vsub.f32 1.0, %v497
    %v499 = vmul.f32 %v496, %v498
    %v500 = vadd.f32 %v496, %v499
    %vm501 = vweird.f32 %v464
    %vm502 = vweird.f32 %v496
    %vm503 = vmor %vm501, %vm502
    %v504 = vsel %vm503, %v496, %v500
    %v505 = vand.u32 2147483647, %v464
    %vm506 = vcmp.eq.f32.partialorder %v505, 8.507059e+37
    %v507 = vand.u32 %v464, 2147483648
    %v508 = vor.u32 1.1754944e-38, %v507
    %v509 = vsel %vm506, %v508, %v504
    %v510 = vmul.f32 1.0, %v509
    %v511 = vrcp.pop %v465
    %v512 = vmul.f32 %v465, %v511
    %v513 = vsub.f32 1.0, %v512
    %v514 = vmul.f32 %v511, %v513
    %v515 = vadd.f32 %v511, %v514
    %vm516 = vweird.f32 %v465
    %vm517 = vweird.f32 %v511
    %vm518 = vmor %vm516, %vm517
    %v519 = vsel %vm518, %v511, %v515
    %v520 = vand.u32 2147483647, %v465
    %vm521 = vcmp.eq.f32.partialorder %v520, 8.507059e+37
    %v522 = vand.u32 %v465, 2147483648
    %v523 = vor.u32 1.1754944e-38, %v522
    %v524 = vsel %vm521, %v523, %v519
    %v525 = vmul.f32 1.0, %v524
    %526 = vset.pattern.permute.xlu0 71
    %527 = vperm.xlu0 %526, %v31
    %v528 = vpop.permute.xlu0 %527
    %530 = vset.pattern.permute.xlu0 71
    %531 = vperm.xlu0 %530, %v32
    %v532 = vpop.permute.xlu0 %531
    %534 = vset.pattern.permute.xlu0 71
    %535 = vperm.xlu0 %534, %v33
    %v536 = vpop.permute.xlu0 %535
    %538 = vset.pattern.permute.xlu0 71
    %539 = vperm.xlu0 %538, %v34
    %v540 = vpop.permute.xlu0 %539
    %v542 = vmul.f32 %v480, %v528
    %v543 = vmul.f32 %v495, %v532
    %v544 = vmul.f32 %v510, %v536
    %v545 = vmul.f32 %v525, %v540
    %v546 = vadd.f32 %v542, %v543
    %v547 = vadd.f32 %v546, %v544
    %v548 = vadd.f32 %v547, %v545
    %v549 = vrot.slane %v548, 4
    %v550 = vadd.f32 %v548, %v549
    %v551 = vrot.slane %v550, 2
    %v552 = vadd.f32 %v550, %v551
    %v553 = vrot.slane %v552, 1
    %v554 = vadd.f32 %v552, %v553
    %555 = vset.pattern.permute.xlu0 72
    %556 = vperm.xlu0 %555, %v31
    %v557 = vpop.permute.xlu0 %556
    %v559 = vadd.f32 %v554, %v557
    %560 = vst [vmem:[#allocation6] sm:$0x1] %v559
    %v561 = vld [vmem:[%s145] sm:$0xff]
    %v562 = vld [vmem:[%s145 + $0x8] sm:$0xff]
    %v563 = vld [vmem:[%s145 + $0x10] sm:$0xff]
    %v564 = vld [vmem:[%s145 + $0x18] sm:$0xff]
    %v565 = vperm.slane %v559, 0
    %v566 = vmul.f32 %v234, %v565
    %v567 = vmul.f32 %v238, %v565
    %v568 = vmul.f32 %v242, %v565
    %v569 = vmul.f32 %v246, %v565
    %v570 = vadd.f32 %v561, %v566
    %v571 = vadd.f32 %v562, %v567
    %v572 = vadd.f32 %v563, %v568
    %v573 = vadd.f32 %v564, %v569
    %574 = vmatpush.msra.mxu0 0.0
    %575 = vmatpush.msra.mxu0 0.0
    %576 = vmatpush.msra.mxu0 0.0
    %577 = vmatpush.msra.mxu0 0.0
    %578 = vmatpush.msra.mxu0 0.0
    %579 = vmatpush.msra.mxu0 0.0
    %580 = vmatpush.msra.mxu0 0.0
    %581 = vmatpush.msra.mxu0 0.0
    %582 = vmatpush.msra.mxu0 0.0
    %583 = vmatpush.msra.mxu0 0.0
    %584 = vmatpush.msra.mxu0 0.0
    %585 = vmatpush.msra.mxu0 0.0
    %586 = vmatpush.msra.mxu0 %v573
    %587 = vmatpush.msra.mxu0 %v572
    %588 = vmatpush.msra.mxu0 %v571
    %589 = vmatpush.msra.mxu0 %v570
    %590 = vmatmul.f32.gmra.mxu0 %v276
    %v591 = vpop.f32.mrf.mxu0
    %v592 = vadd.f32 %v261, %v591
    %593 = vmatmul.f32.gmra.mxu0 %v278
    %v594 = vpop.f32.mrf.mxu0
    %v595 = vadd.f32 %v265, %v594
    %596 = vmatmul.f32.gmra.mxu0 %v280
    %v597 = vpop.f32.mrf.mxu0
    %v598 = vadd.f32 %v269, %v597
    %599 = vmatmul.f32.gmra.mxu0 %v282
    %v600 = vpop.f32.mrf.mxu0
    %v601 = vadd.f32 %v273, %v600
    %602 = vdwg.mxu0
    %v603 = vxor.u32 %v592, 2147483648
    %v604 = vxor.u32 %v595, 2147483648
    %v605 = vxor.u32 %v598, 2147483648
    %v606 = vxor.u32 %v601, 2147483648
    %v607 = vmul.f32 %v603, 1.442695
    %v608 = vpow.pop %v607
    %v609 = vmul.f32 %v604, 1.442695
    %v610 = vpow.pop %v609
    %v611 = vmul.f32 %v605, 1.442695
    %v612 = vpow.pop %v611
    %v613 = vmul.f32 %v606, 1.442695
    %v614 = vpow.pop %v613
    %v615 = vadd.f32 %v608, 1.0
    %v616 = vadd.f32 %v610, 1.0
    %v617 = vadd.f32 %v612, 1.0
    %v618 = vadd.f32 %v614, 1.0
    %v619 = vrcp.pop %v615
    %v620 = vmul.f32 %v615, %v619
    %v621 = vsub.f32 1.0, %v620
    %v622 = vmul.f32 %v619, %v621
    %v623 = vadd.f32 %v619, %v622
    %vm624 = vweird.f32 %v615
    %vm625 = vweird.f32 %v619
    %vm626 = vmor %vm624, %vm625
    %v627 = vsel %vm626, %v619, %v623
    %v628 = vand.u32 2147483647, %v615
    %vm629 = vcmp.eq.f32.partialorder %v628, 8.507059e+37
    %v630 = vand.u32 %v615, 2147483648
    %v631 = vor.u32 1.1754944e-38, %v630
    %v632 = vsel %vm629, %v631, %v627
    %v633 = vmul.f32 1.0, %v632
    %v634 = vrcp.pop %v616
    %v635 = vmul.f32 %v616, %v634
    %v636 = vsub.f32 1.0, %v635
    %v637 = vmul.f32 %v634, %v636
    %v638 = vadd.f32 %v634, %v637
    %vm639 = vweird.f32 %v616
    %vm640 = vweird.f32 %v634
    %vm641 = vmor %vm639, %vm640
    %v642 = vsel %vm641, %v634, %v638
    %v643 = vand.u32 2147483647, %v616
    %vm644 = vcmp.eq.f32.partialorder %v643, 8.507059e+37
    %v645 = vand.u32 %v616, 2147483648
    %v646 = vor.u32 1.1754944e-38, %v645
    %v647 = vsel %vm644, %v646, %v642
    %v648 = vmul.f32 1.0, %v647
    %v649 = vrcp.pop %v617
    %v650 = vmul.f32 %v617, %v649
    %v651 = vsub.f32 1.0, %v650
    %v652 = vmul.f32 %v649, %v651
    %v653 = vadd.f32 %v649, %v652
    %vm654 = vweird.f32 %v617
    %vm655 = vweird.f32 %v649
    %vm656 = vmor %vm654, %vm655
    %v657 = vsel %vm656, %v649, %v653
    %v658 = vand.u32 2147483647, %v617
    %vm659 = vcmp.eq.f32.partialorder %v658, 8.507059e+37
    %v660 = vand.u32 %v617, 2147483648
    %v661 = vor.u32 1.1754944e-38, %v660
    %v662 = vsel %vm659, %v661, %v657
    %v663 = vmul.f32 1.0, %v662
    %v664 = vrcp.pop %v618
    %v665 = vmul.f32 %v618, %v664
    %v666 = vsub.f32 1.0, %v665
    %v667 = vmul.f32 %v664, %v666
    %v668 = vadd.f32 %v664, %v667
    %vm669 = vweird.f32 %v618
    %vm670 = vweird.f32 %v664
    %vm671 = vmor %vm669, %vm670
    %v672 = vsel %vm671, %v664, %v668
    %v673 = vand.u32 2147483647, %v618
    %vm674 = vcmp.eq.f32.partialorder %v673, 8.507059e+37
    %v675 = vand.u32 %v618, 2147483648
    %v676 = vor.u32 1.1754944e-38, %v675
    %v677 = vsel %vm674, %v676, %v672
    %v678 = vmul.f32 1.0, %v677
    %679 = vmatpush.msra.mxu0 0.0
    %680 = vmatpush.msra.mxu0 0.0
    %681 = vmatpush.msra.mxu0 0.0
    %682 = vmatpush.msra.mxu0 0.0
    %683 = vmatpush.msra.mxu0 0.0
    %684 = vmatpush.msra.mxu0 0.0
    %685 = vmatpush.msra.mxu0 0.0
    %686 = vmatpush.msra.mxu0 0.0
    %687 = vmatpush.msra.mxu0 0.0
    %688 = vmatpush.msra.mxu0 0.0
    %689 = vmatpush.msra.mxu0 0.0
    %690 = vmatpush.msra.mxu0 0.0
    %691 = vmatpush.msra.mxu0 %v678
    %692 = vmatpush.msra.mxu0 %v663
    %693 = vmatpush.msra.mxu0 %v648
    %694 = vmatpush.msra.mxu0 %v633
    %695 = vmatmul.f32.gmra.mxu0 %v413
    %v696 = vpop.f32.mrf.mxu0
    %v697 = vadd.f32 %v391, %v696
    %698 = vmatmul.f32.gmra.mxu0 %v415
    %v699 = vpop.f32.mrf.mxu0
    %v700 = vadd.f32 %v395, %v699
    %701 = vmatmul.f32.gmra.mxu0 %v417
    %v702 = vpop.f32.mrf.mxu0
    %v703 = vadd.f32 %v399, %v702
    %704 = vmatmul.f32.gmra.mxu0 %v419
    %v705 = vpop.f32.mrf.mxu0
    %v706 = vadd.f32 %v403, %v705
    %707 = vdwg.mxu0
    %v708 = vxor.u32 %v697, 2147483648
    %v709 = vxor.u32 %v700, 2147483648
    %v710 = vxor.u32 %v703, 2147483648
    %v711 = vxor.u32 %v706, 2147483648
    %v712 = vmul.f32 %v708, 1.442695
    %v713 = vpow.pop %v712
    %v714 = vmul.f32 %v709, 1.442695
    %v715 = vpow.pop %v714
    %v716 = vmul.f32 %v710, 1.442695
    %v717 = vpow.pop %v716
    %v718 = vmul.f32 %v711, 1.442695
    %v719 = vpow.pop %v718
    %v720 = vadd.f32 %v713, 1.0
    %v721 = vadd.f32 %v715, 1.0
    %v722 = vadd.f32 %v717, 1.0
    %v723 = vadd.f32 %v719, 1.0
    %v724 = vrcp.pop %v720
    %v725 = vmul.f32 %v720, %v724
    %v726 = vsub.f32 1.0, %v725
    %v727 = vmul.f32 %v724, %v726
    %v728 = vadd.f32 %v724, %v727
    %vm729 = vweird.f32 %v720
    %vm730 = vweird.f32 %v724
    %vm731 = vmor %vm729, %vm730
    %v732 = vsel %vm731, %v724, %v728
    %v733 = vand.u32 2147483647, %v720
    %vm734 = vcmp.eq.f32.partialorder %v733, 8.507059e+37
    %v735 = vand.u32 %v720, 2147483648
    %v736 = vor.u32 1.1754944e-38, %v735
    %v737 = vsel %vm734, %v736, %v732
    %v738 = vmul.f32 1.0, %v737
    %v739 = vrcp.pop %v721
    %v740 = vmul.f32 %v721, %v739
    %v741 = vsub.f32 1.0, %v740
    %v742 = vmul.f32 %v739, %v741
    %v743 = vadd.f32 %v739, %v742
    %vm744 = vweird.f32 %v721
    %vm745 = vweird.f32 %v739
    %vm746 = vmor %vm744, %vm745
    %v747 = vsel %vm746, %v739, %v743
    %v748 = vand.u32 2147483647, %v721
    %vm749 = vcmp.eq.f32.partialorder %v748, 8.507059e+37
    %v750 = vand.u32 %v721, 2147483648
    %v751 = vor.u32 1.1754944e-38, %v750
    %v752 = vsel %vm749, %v751, %v747
    %v753 = vmul.f32 1.0, %v752
    %v754 = vrcp.pop %v722
    %v755 = vmul.f32 %v722, %v754
    %v756 = vsub.f32 1.0, %v755
    %v757 = vmul.f32 %v754, %v756
    %v758 = vadd.f32 %v754, %v757
    %vm759 = vweird.f32 %v722
    %vm760 = vweird.f32 %v754
    %vm761 = vmor %vm759, %vm760
    %v762 = vsel %vm761, %v754, %v758
    %v763 = vand.u32 2147483647, %v722
    %vm764 = vcmp.eq.f32.partialorder %v763, 8.507059e+37
    %v765 = vand.u32 %v722, 2147483648
    %v766 = vor.u32 1.1754944e-38, %v765
    %v767 = vsel %vm764, %v766, %v762
    %v768 = vmul.f32 1.0, %v767
    %v769 = vrcp.pop %v723
    %v770 = vmul.f32 %v723, %v769
    %v771 = vsub.f32 1.0, %v770
    %v772 = vmul.f32 %v769, %v771
    %v773 = vadd.f32 %v769, %v772
    %vm774 = vweird.f32 %v723
    %vm775 = vweird.f32 %v769
    %vm776 = vmor %vm774, %vm775
    %v777 = vsel %vm776, %v769, %v773
    %v778 = vand.u32 2147483647, %v723
    %vm779 = vcmp.eq.f32.partialorder %v778, 8.507059e+37
    %v780 = vand.u32 %v723, 2147483648
    %v781 = vor.u32 1.1754944e-38, %v780
    %v782 = vsel %vm779, %v781, %v777
    %v783 = vmul.f32 1.0, %v782
    %v784 = vmul.f32 %v738, %v528
    %v785 = vmul.f32 %v753, %v532
    %v786 = vmul.f32 %v768, %v536
    %v787 = vmul.f32 %v783, %v540
    %v788 = vadd.f32 %v784, %v785
    %v789 = vadd.f32 %v788, %v786
    %v790 = vadd.f32 %v789, %v787
    %v791 = vrot.slane %v790, 4
    %v792 = vadd.f32 %v790, %v791
    %v793 = vrot.slane %v792, 2
    %v794 = vadd.f32 %v792, %v793
    %v795 = vrot.slane %v794, 1
    %v796 = vadd.f32 %v794, %v795
    %v797 = vadd.f32 %v796, %v557
    %798 = vst [vmem:[#allocation6 + $0x1] sm:$0x1] %v797
    %v799 = vld [vmem:[%s184] sm:$0xff]
    %v800 = vld [vmem:[%s184 + $0x8] sm:$0xff]
    %v801 = vld [vmem:[%s184 + $0x10] sm:$0xff]
    %v802 = vld [vmem:[%s184 + $0x18] sm:$0xff]
    %v803 = vperm.slane %v797, 0
    %v804 = vmul.f32 %v234, %v803
    %v805 = vmul.f32 %v238, %v803
    %v806 = vmul.f32 %v242, %v803
    %v807 = vmul.f32 %v246, %v803
    %v808 = vadd.f32 %v799, %v804
    %v809 = vadd.f32 %v800, %v805
    %v810 = vadd.f32 %v801, %v806
    %v811 = vadd.f32 %v802, %v807
    %812 = vmatpush.msra.mxu0 0.0
    %813 = vmatpush.msra.mxu0 0.0
    %814 = vmatpush.msra.mxu0 0.0
    %815 = vmatpush.msra.mxu0 0.0
    %816 = vmatpush.msra.mxu0 0.0
    %817 = vmatpush.msra.mxu0 0.0
    %818 = vmatpush.msra.mxu0 0.0
    %819 = vmatpush.msra.mxu0 0.0
    %820 = vmatpush.msra.mxu0 0.0
    %821 = vmatpush.msra.mxu0 0.0
    %822 = vmatpush.msra.mxu0 0.0
    %823 = vmatpush.msra.mxu0 0.0
    %824 = vmatpush.msra.mxu0 %v811
    %825 = vmatpush.msra.mxu0 %v810
    %826 = vmatpush.msra.mxu0 %v809
    %827 = vmatpush.msra.mxu0 %v808
    %828 = vmatmul.f32.gmra.mxu0 %v276
    %v829 = vpop.f32.mrf.mxu0
    %v830 = vadd.f32 %v261, %v829
    %831 = vmatmul.f32.gmra.mxu0 %v278
    %v832 = vpop.f32.mrf.mxu0
    %v833 = vadd.f32 %v265, %v832
    %834 = vmatmul.f32.gmra.mxu0 %v280
    %v835 = vpop.f32.mrf.mxu0
    %v836 = vadd.f32 %v269, %v835
    %837 = vmatmul.f32.gmra.mxu0 %v282
    %v838 = vpop.f32.mrf.mxu0
    %v839 = vadd.f32 %v273, %v838
    %840 = vdwg.mxu0
    %v841 = vxor.u32 %v830, 2147483648
    %v842 = vxor.u32 %v833, 2147483648
    %v843 = vxor.u32 %v836, 2147483648
    %v844 = vxor.u32 %v839, 2147483648
    %v845 = vmul.f32 %v841, 1.442695
    %v846 = vpow.pop %v845
    %v847 = vmul.f32 %v842, 1.442695
    %v848 = vpow.pop %v847
    %v849 = vmul.f32 %v843, 1.442695
    %v850 = vpow.pop %v849
    %v851 = vmul.f32 %v844, 1.442695
    %v852 = vpow.pop %v851
    %v853 = vadd.f32 %v846, 1.0
    %v854 = vadd.f32 %v848, 1.0
    %v855 = vadd.f32 %v850, 1.0
    %v856 = vadd.f32 %v852, 1.0
    %v857 = vrcp.pop %v853
    %v858 = vmul.f32 %v853, %v857
    %v859 = vsub.f32 1.0, %v858
    %v860 = vmul.f32 %v857, %v859
    %v861 = vadd.f32 %v857, %v860
    %vm862 = vweird.f32 %v853
    %vm863 = vweird.f32 %v857
    %vm864 = vmor %vm862, %vm863
    %v865 = vsel %vm864, %v857, %v861
    %v866 = vand.u32 2147483647, %v853
    %vm867 = vcmp.eq.f32.partialorder %v866, 8.507059e+37
    %v868 = vand.u32 %v853, 2147483648
    %v869 = vor.u32 1.1754944e-38, %v868
    %v870 = vsel %vm867, %v869, %v865
    %v871 = vmul.f32 1.0, %v870
    %v872 = vrcp.pop %v854
    %v873 = vmul.f32 %v854, %v872
    %v874 = vsub.f32 1.0, %v873
    %v875 = vmul.f32 %v872, %v874
    %v876 = vadd.f32 %v872, %v875
    %vm877 = vweird.f32 %v854
    %vm878 = vweird.f32 %v872
    %vm879 = vmor %vm877, %vm878
    %v880 = vsel %vm879, %v872, %v876
    %v881 = vand.u32 2147483647, %v854
    %vm882 = vcmp.eq.f32.partialorder %v881, 8.507059e+37
    %v883 = vand.u32 %v854, 2147483648
    %v884 = vor.u32 1.1754944e-38, %v883
    %v885 = vsel %vm882, %v884, %v880
    %v886 = vmul.f32 1.0, %v885
    %v887 = vrcp.pop %v855
    %v888 = vmul.f32 %v855, %v887
    %v889 = vsub.f32 1.0, %v888
    %v890 = vmul.f32 %v887, %v889
    %v891 = vadd.f32 %v887, %v890
    %vm892 = vweird.f32 %v855
    %vm893 = vweird.f32 %v887
    %vm894 = vmor %vm892, %vm893
    %v895 = vsel %vm894, %v887, %v891
    %v896 = vand.u32 2147483647, %v855
    %vm897 = vcmp.eq.f32.partialorder %v896, 8.507059e+37
    %v898 = vand.u32 %v855, 2147483648
    %v899 = vor.u32 1.1754944e-38, %v898
    %v900 = vsel %vm897, %v899, %v895
    %v901 = vmul.f32 1.0, %v900
    %v902 = vrcp.pop %v856
    %v903 = vmul.f32 %v856, %v902
    %v904 = vsub.f32 1.0, %v903
    %v905 = vmul.f32 %v902, %v904
    %v906 = vadd.f32 %v902, %v905
    %vm907 = vweird.f32 %v856
    %vm908 = vweird.f32 %v902
    %vm909 = vmor %vm907, %vm908
    %v910 = vsel %vm909, %v902, %v906
    %v911 = vand.u32 2147483647, %v856
    %vm912 = vcmp.eq.f32.partialorder %v911, 8.507059e+37
    %v913 = vand.u32 %v856, 2147483648
    %v914 = vor.u32 1.1754944e-38, %v913
    %v915 = vsel %vm912, %v914, %v910
    %v916 = vmul.f32 1.0, %v915
    %917 = vmatpush.msra.mxu0 0.0
    %918 = vmatpush.msra.mxu0 0.0
    %919 = vmatpush.msra.mxu0 0.0
    %920 = vmatpush.msra.mxu0 0.0
    %921 = vmatpush.msra.mxu0 0.0
    %922 = vmatpush.msra.mxu0 0.0
    %923 = vmatpush.msra.mxu0 0.0
    %924 = vmatpush.msra.mxu0 0.0
    %925 = vmatpush.msra.mxu0 0.0
    %926 = vmatpush.msra.mxu0 0.0
    %927 = vmatpush.msra.mxu0 0.0
    %928 = vmatpush.msra.mxu0 0.0
    %929 = vmatpush.msra.mxu0 %v916
    %930 = vmatpush.msra.mxu0 %v901
    %931 = vmatpush.msra.mxu0 %v886
    %932 = vmatpush.msra.mxu0 %v871
    %933 = vmatmul.f32.gmra.mxu0 %v413
    %v934 = vpop.f32.mrf.mxu0
    %v935 = vadd.f32 %v391, %v934
    %936 = vmatmul.f32.gmra.mxu0 %v415
    %v937 = vpop.f32.mrf.mxu0
    %v938 = vadd.f32 %v395, %v937
    %939 = vmatmul.f32.gmra.mxu0 %v417
    %v940 = vpop.f32.mrf.mxu0
    %v941 = vadd.f32 %v399, %v940
    %942 = vmatmul.f32.gmra.mxu0 %v419
    %v943 = vpop.f32.mrf.mxu0
    %v944 = vadd.f32 %v403, %v943
    %945 = vdwg.mxu0
    %v946 = vxor.u32 %v935, 2147483648
    %v947 = vxor.u32 %v938, 2147483648
    %v948 = vxor.u32 %v941, 2147483648
    %v949 = vxor.u32 %v944, 2147483648
    %v950 = vmul.f32 %v946, 1.442695
    %v951 = vpow.pop %v950
    %v952 = vmul.f32 %v947, 1.442695
    %v953 = vpow.pop %v952
    %v954 = vmul.f32 %v948, 1.442695
    %v955 = vpow.pop %v954
    %v956 = vmul.f32 %v949, 1.442695
    %v957 = vpow.pop %v956
    %v958 = vadd.f32 %v951, 1.0
    %v959 = vadd.f32 %v953, 1.0
    %v960 = vadd.f32 %v955, 1.0
    %v961 = vadd.f32 %v957, 1.0
    %v962 = vrcp.pop %v958
    %v963 = vmul.f32 %v958, %v962
    %v964 = vsub.f32 1.0, %v963
    %v965 = vmul.f32 %v962, %v964
    %v966 = vadd.f32 %v962, %v965
    %vm967 = vweird.f32 %v958
    %vm968 = vweird.f32 %v962
    %vm969 = vmor %vm967, %vm968
    %v970 = vsel %vm969, %v962, %v966
    %v971 = vand.u32 2147483647, %v958
    %vm972 = vcmp.eq.f32.partialorder %v971, 8.507059e+37
    %v973 = vand.u32 %v958, 2147483648
    %v974 = vor.u32 1.1754944e-38, %v973
    %v975 = vsel %vm972, %v974, %v970
    %v976 = vmul.f32 1.0, %v975
    %v977 = vrcp.pop %v959
    %v978 = vmul.f32 %v959, %v977
    %v979 = vsub.f32 1.0, %v978
    %v980 = vmul.f32 %v977, %v979
    %v981 = vadd.f32 %v977, %v980
    %vm982 = vweird.f32 %v959
    %vm983 = vweird.f32 %v977
    %vm984 = vmor %vm982, %vm983
    %v985 = vsel %vm984, %v977, %v981
    %v986 = vand.u32 2147483647, %v959
    %vm987 = vcmp.eq.f32.partialorder %v986, 8.507059e+37
    %v988 = vand.u32 %v959, 2147483648
    %v989 = vor.u32 1.1754944e-38, %v988
    %v990 = vsel %vm987, %v989, %v985
    %v991 = vmul.f32 1.0, %v990
    %v992 = vrcp.pop %v960
    %v993 = vmul.f32 %v960, %v992
    %v994 = vsub.f32 1.0, %v993
    %v995 = vmul.f32 %v992, %v994
    %v996 = vadd.f32 %v992, %v995
    %vm997 = vweird.f32 %v960
    %vm998 = vweird.f32 %v992
    %vm999 = vmor %vm997, %vm998
    %v1000 = vsel %vm999, %v992, %v996
    %v1001 = vand.u32 2147483647, %v960
    %vm1002 = vcmp.eq.f32.partialorder %v1001, 8.507059e+37
    %v1003 = vand.u32 %v960, 2147483648
    %v1004 = vor.u32 1.1754944e-38, %v1003
    %v1005 = vsel %vm1002, %v1004, %v1000
    %v1006 = vmul.f32 1.0, %v1005
    %v1007 = vrcp.pop %v961
    %v1008 = vmul.f32 %v961, %v1007
    %v1009 = vsub.f32 1.0, %v1008
    %v1010 = vmul.f32 %v1007, %v1009
    %v1011 = vadd.f32 %v1007, %v1010
    %vm1012 = vweird.f32 %v961
    %vm1013 = vweird.f32 %v1007
    %vm1014 = vmor %vm1012, %vm1013
    %v1015 = vsel %vm1014, %v1007, %v1011
    %v1016 = vand.u32 2147483647, %v961
    %vm1017 = vcmp.eq.f32.partialorder %v1016, 8.507059e+37
    %v1018 = vand.u32 %v961, 2147483648
    %v1019 = vor.u32 1.1754944e-38, %v1018
    %v1020 = vsel %vm1017, %v1019, %v1015
    %v1021 = vmul.f32 1.0, %v1020
    %v1022 = vmul.f32 %v976, %v528
    %v1023 = vmul.f32 %v991, %v532
    %v1024 = vmul.f32 %v1006, %v536
    %v1025 = vmul.f32 %v1021, %v540
    %v1026 = vadd.f32 %v1022, %v1023
    %v1027 = vadd.f32 %v1026, %v1024
    %v1028 = vadd.f32 %v1027, %v1025
    %v1029 = vrot.slane %v1028, 4
    %v1030 = vadd.f32 %v1028, %v1029
    %v1031 = vrot.slane %v1030, 2
    %v1032 = vadd.f32 %v1030, %v1031
    %v1033 = vrot.slane %v1032, 1
    %v1034 = vadd.f32 %v1032, %v1033
    %v1035 = vadd.f32 %v1034, %v557
    %1036 = vst [vmem:[#allocation6 + $0x2] sm:$0x1] %v1035
    %v1037 = vld [vmem:[%s223] sm:$0xff]
    %v1038 = vld [vmem:[%s223 + $0x8] sm:$0xff]
    %v1039 = vld [vmem:[%s223 + $0x10] sm:$0xff]
    %v1040 = vld [vmem:[%s223 + $0x18] sm:$0xff]
    %v1041 = vperm.slane %v1035, 0
    %v1042 = vmul.f32 %v234, %v1041
    %v1043 = vmul.f32 %v238, %v1041
    %v1044 = vmul.f32 %v242, %v1041
    %v1045 = vmul.f32 %v246, %v1041
    %v1046 = vadd.f32 %v1037, %v1042
    %v1047 = vadd.f32 %v1038, %v1043
    %v1048 = vadd.f32 %v1039, %v1044
    %v1049 = vadd.f32 %v1040, %v1045
    %1050 = vmatpush.msra.mxu0 0.0
    %1051 = vmatpush.msra.mxu0 0.0
    %1052 = vmatpush.msra.mxu0 0.0
    %1053 = vmatpush.msra.mxu0 0.0
    %1054 = vmatpush.msra.mxu0 0.0
    %1055 = vmatpush.msra.mxu0 0.0
    %1056 = vmatpush.msra.mxu0 0.0
    %1057 = vmatpush.msra.mxu0 0.0
    %1058 = vmatpush.msra.mxu0 0.0
    %1059 = vmatpush.msra.mxu0 0.0
    %1060 = vmatpush.msra.mxu0 0.0
    %1061 = vmatpush.msra.mxu0 0.0
    %1062 = vmatpush.msra.mxu0 %v1049
    %1063 = vmatpush.msra.mxu0 %v1048
    %1064 = vmatpush.msra.mxu0 %v1047
    %1065 = vmatpush.msra.mxu0 %v1046
    %1066 = vmatmul.f32.gmra.mxu0 %v276
    %v1067 = vpop.f32.mrf.mxu0
    %v1068 = vadd.f32 %v261, %v1067
    %1069 = vmatmul.f32.gmra.mxu0 %v278
    %v1070 = vpop.f32.mrf.mxu0
    %v1071 = vadd.f32 %v265, %v1070
    %1072 = vmatmul.f32.gmra.mxu0 %v280
    %v1073 = vpop.f32.mrf.mxu0
    %v1074 = vadd.f32 %v269, %v1073
    %1075 = vmatmul.f32.gmra.mxu0 %v282
    %v1076 = vpop.f32.mrf.mxu0
    %v1077 = vadd.f32 %v273, %v1076
    %1078 = vdwg.mxu0
    %v1079 = vxor.u32 %v1068, 2147483648
    %v1080 = vxor.u32 %v1071, 2147483648
    %v1081 = vxor.u32 %v1074, 2147483648
    %v1082 = vxor.u32 %v1077, 2147483648
    %v1083 = vmul.f32 %v1079, 1.442695
    %v1084 = vpow.pop %v1083
    %v1085 = vmul.f32 %v1080, 1.442695
    %v1086 = vpow.pop %v1085
    %v1087 = vmul.f32 %v1081, 1.442695
    %v1088 = vpow.pop %v1087
    %v1089 = vmul.f32 %v1082, 1.442695
    %v1090 = vpow.pop %v1089
    %v1091 = vadd.f32 %v1084, 1.0
    %v1092 = vadd.f32 %v1086, 1.0
    %v1093 = vadd.f32 %v1088, 1.0
    %v1094 = vadd.f32 %v1090, 1.0
    %v1095 = vrcp.pop %v1091
    %v1096 = vmul.f32 %v1091, %v1095
    %v1097 = vsub.f32 1.0, %v1096
    %v1098 = vmul.f32 %v1095, %v1097
    %v1099 = vadd.f32 %v1095, %v1098
    %vm1100 = vweird.f32 %v1091
    %vm1101 = vweird.f32 %v1095
    %vm1102 = vmor %vm1100, %vm1101
    %v1103 = vsel %vm1102, %v1095, %v1099
    %v1104 = vand.u32 2147483647, %v1091
    %vm1105 = vcmp.eq.f32.partialorder %v1104, 8.507059e+37
    %v1106 = vand.u32 %v1091, 2147483648
    %v1107 = vor.u32 1.1754944e-38, %v1106
    %v1108 = vsel %vm1105, %v1107, %v1103
    %v1109 = vmul.f32 1.0, %v1108
    %v1110 = vrcp.pop %v1092
    %v1111 = vmul.f32 %v1092, %v1110
    %v1112 = vsub.f32 1.0, %v1111
    %v1113 = vmul.f32 %v1110, %v1112
    %v1114 = vadd.f32 %v1110, %v1113
    %vm1115 = vweird.f32 %v1092
    %vm1116 = vweird.f32 %v1110
    %vm1117 = vmor %vm1115, %vm1116
    %v1118 = vsel %vm1117, %v1110, %v1114
    %v1119 = vand.u32 2147483647, %v1092
    %vm1120 = vcmp.eq.f32.partialorder %v1119, 8.507059e+37
    %v1121 = vand.u32 %v1092, 2147483648
    %v1122 = vor.u32 1.1754944e-38, %v1121
    %v1123 = vsel %vm1120, %v1122, %v1118
    %v1124 = vmul.f32 1.0, %v1123
    %v1125 = vrcp.pop %v1093
    %v1126 = vmul.f32 %v1093, %v1125
    %v1127 = vsub.f32 1.0, %v1126
    %v1128 = vmul.f32 %v1125, %v1127
    %v1129 = vadd.f32 %v1125, %v1128
    %vm1130 = vweird.f32 %v1093
    %vm1131 = vweird.f32 %v1125
    %vm1132 = vmor %vm1130, %vm1131
    %v1133 = vsel %vm1132, %v1125, %v1129
    %v1134 = vand.u32 2147483647, %v1093
    %vm1135 = vcmp.eq.f32.partialorder %v1134, 8.507059e+37
    %v1136 = vand.u32 %v1093, 2147483648
    %v1137 = vor.u32 1.1754944e-38, %v1136
    %v1138 = vsel %vm1135, %v1137, %v1133
    %v1139 = vmul.f32 1.0, %v1138
    %v1140 = vrcp.pop %v1094
    %v1141 = vmul.f32 %v1094, %v1140
    %v1142 = vsub.f32 1.0, %v1141
    %v1143 = vmul.f32 %v1140, %v1142
    %v1144 = vadd.f32 %v1140, %v1143
    %vm1145 = vweird.f32 %v1094
    %vm1146 = vweird.f32 %v1140
    %vm1147 = vmor %vm1145, %vm1146
    %v1148 = vsel %vm1147, %v1140, %v1144
    %v1149 = vand.u32 2147483647, %v1094
    %vm1150 = vcmp.eq.f32.partialorder %v1149, 8.507059e+37
    %v1151 = vand.u32 %v1094, 2147483648
    %v1152 = vor.u32 1.1754944e-38, %v1151
    %v1153 = vsel %vm1150, %v1152, %v1148
    %v1154 = vmul.f32 1.0, %v1153
    %1155 = vmatpush.msra.mxu0 0.0
    %1156 = vmatpush.msra.mxu0 0.0
    %1157 = vmatpush.msra.mxu0 0.0
    %1158 = vmatpush.msra.mxu0 0.0
    %1159 = vmatpush.msra.mxu0 0.0
    %1160 = vmatpush.msra.mxu0 0.0
    %1161 = vmatpush.msra.mxu0 0.0
    %1162 = vmatpush.msra.mxu0 0.0
    %1163 = vmatpush.msra.mxu0 0.0
    %1164 = vmatpush.msra.mxu0 0.0
    %1165 = vmatpush.msra.mxu0 0.0
    %1166 = vmatpush.msra.mxu0 0.0
    %1167 = vmatpush.msra.mxu0 %v1154
    %1168 = vmatpush.msra.mxu0 %v1139
    %1169 = vmatpush.msra.mxu0 %v1124
    %1170 = vmatpush.msra.mxu0 %v1109
    %1171 = vmatmul.f32.gmra.mxu0 %v413
    %v1172 = vpop.f32.mrf.mxu0
    %v1173 = vadd.f32 %v391, %v1172
    %1174 = vmatmul.f32.gmra.mxu0 %v415
    %v1175 = vpop.f32.mrf.mxu0
    %v1176 = vadd.f32 %v395, %v1175
    %1177 = vmatmul.f32.gmra.mxu0 %v417
    %v1178 = vpop.f32.mrf.mxu0
    %v1179 = vadd.f32 %v399, %v1178
    %1180 = vmatmul.f32.gmra.mxu0 %v419
    %v1181 = vpop.f32.mrf.mxu0
    %v1182 = vadd.f32 %v403, %v1181
    %1183 = vdwg.mxu0
    %v1184 = vxor.u32 %v1173, 2147483648
    %v1185 = vxor.u32 %v1176, 2147483648
    %v1186 = vxor.u32 %v1179, 2147483648
    %v1187 = vxor.u32 %v1182, 2147483648
    %v1188 = vmul.f32 %v1184, 1.442695
    %v1189 = vpow.pop %v1188
    %v1190 = vmul.f32 %v1185, 1.442695
    %v1191 = vpow.pop %v1190
    %v1192 = vmul.f32 %v1186, 1.442695
    %v1193 = vpow.pop %v1192
    %v1194 = vmul.f32 %v1187, 1.442695
    %v1195 = vpow.pop %v1194
    %v1196 = vadd.f32 %v1189, 1.0
    %v1197 = vadd.f32 %v1191, 1.0
    %v1198 = vadd.f32 %v1193, 1.0
    %v1199 = vadd.f32 %v1195, 1.0
    %v1200 = vrcp.pop %v1196
    %v1201 = vmul.f32 %v1196, %v1200
    %v1202 = vsub.f32 1.0, %v1201
    %v1203 = vmul.f32 %v1200, %v1202
    %v1204 = vadd.f32 %v1200, %v1203
    %vm1205 = vweird.f32 %v1196
    %vm1206 = vweird.f32 %v1200
    %vm1207 = vmor %vm1205, %vm1206
    %v1208 = vsel %vm1207, %v1200, %v1204
    %v1209 = vand.u32 2147483647, %v1196
    %vm1210 = vcmp.eq.f32.partialorder %v1209, 8.507059e+37
    %v1211 = vand.u32 %v1196, 2147483648
    %v1212 = vor.u32 1.1754944e-38, %v1211
    %v1213 = vsel %vm1210, %v1212, %v1208
    %v1214 = vmul.f32 1.0, %v1213
    %v1215 = vrcp.pop %v1197
    %v1216 = vmul.f32 %v1197, %v1215
    %v1217 = vsub.f32 1.0, %v1216
    %v1218 = vmul.f32 %v1215, %v1217
    %v1219 = vadd.f32 %v1215, %v1218
    %vm1220 = vweird.f32 %v1197
    %vm1221 = vweird.f32 %v1215
    %vm1222 = vmor %vm1220, %vm1221
    %v1223 = vsel %vm1222, %v1215, %v1219
    %v1224 = vand.u32 2147483647, %v1197
    %vm1225 = vcmp.eq.f32.partialorder %v1224, 8.507059e+37
    %v1226 = vand.u32 %v1197, 2147483648
    %v1227 = vor.u32 1.1754944e-38, %v1226
    %v1228 = vsel %vm1225, %v1227, %v1223
    %v1229 = vmul.f32 1.0, %v1228
    %v1230 = vrcp.pop %v1198
    %v1231 = vmul.f32 %v1198, %v1230
    %v1232 = vsub.f32 1.0, %v1231
    %v1233 = vmul.f32 %v1230, %v1232
    %v1234 = vadd.f32 %v1230, %v1233
    %vm1235 = vweird.f32 %v1198
    %vm1236 = vweird.f32 %v1230
    %vm1237 = vmor %vm1235, %vm1236
    %v1238 = vsel %vm1237, %v1230, %v1234
    %v1239 = vand.u32 2147483647, %v1198
    %vm1240 = vcmp.eq.f32.partialorder %v1239, 8.507059e+37
    %v1241 = vand.u32 %v1198, 2147483648
    %v1242 = vor.u32 1.1754944e-38, %v1241
    %v1243 = vsel %vm1240, %v1242, %v1238
    %v1244 = vmul.f32 1.0, %v1243
    %v1245 = vrcp.pop %v1199
    %v1246 = vmul.f32 %v1199, %v1245
    %v1247 = vsub.f32 1.0, %v1246
    %v1248 = vmul.f32 %v1245, %v1247
    %v1249 = vadd.f32 %v1245, %v1248
    %vm1250 = vweird.f32 %v1199
    %vm1251 = vweird.f32 %v1245
    %vm1252 = vmor %vm1250, %vm1251
    %v1253 = vsel %vm1252, %v1245, %v1249
    %v1254 = vand.u32 2147483647, %v1199
    %vm1255 = vcmp.eq.f32.partialorder %v1254, 8.507059e+37
    %v1256 = vand.u32 %v1199, 2147483648
    %v1257 = vor.u32 1.1754944e-38, %v1256
    %v1258 = vsel %vm1255, %v1257, %v1253
    %v1259 = vmul.f32 1.0, %v1258
    %v1260 = vmul.f32 %v1214, %v528
    %v1261 = vmul.f32 %v1229, %v532
    %v1262 = vmul.f32 %v1244, %v536
    %v1263 = vmul.f32 %v1259, %v540
    %v1264 = vadd.f32 %v1260, %v1261
    %v1265 = vadd.f32 %v1264, %v1262
    %v1266 = vadd.f32 %v1265, %v1263
    %v1267 = vrot.slane %v1266, 4
    %v1268 = vadd.f32 %v1266, %v1267
    %v1269 = vrot.slane %v1268, 2
    %v1270 = vadd.f32 %v1268, %v1269
    %v1271 = vrot.slane %v1270, 1
    %v1272 = vadd.f32 %v1270, %v1271
    %v1273 = vadd.f32 %v1272, %v557
    %1274 = vst [vmem:[#allocation6 + $0x3] sm:$0x1] %v1273
    // Predicated region
    $region18: #{tpu_custom_call.1} parent=1 // pred_check
      _
    $region19: #{tpu_custom_call.1} parent=1 // pred_check_branch
      %1276 = sbr.rel (0) target = $region21
    $region20: #{tpu_custom_call.1} parent=1 // pred_region
      %1278 = vsyncadd [#allocation5], 0
      %s1280 = sshll.u32 [#allocation6], 4
      %s1281 = int_to_ptr.vmem [resolvable:$true] %s1280
      %s1282 = sshll.u32 %s3, 4
      %s1283 = int_to_ptr.hbm [resolvable:$true] %s1282
      %1285 = dma.vmem_to_hbm [thread:$0]  %s1281, 64, %s1283, [#allocation5]
    $region21: #{tpu_custom_call.1} parent=1 // pred_fallthru
      _
    // Predicated region
    $region22: #{tpu_custom_call.1} parent=1 // pred_check
      _
    $region23: #{tpu_custom_call.1} parent=1 // pred_check_branch
      %1287 = sbr.rel (0) target = $region25
    $region24: #{tpu_custom_call.1} parent=1 // pred_region
      %1289 = dma.done [#allocation5], 64
    $region25: #{tpu_custom_call.1} parent=1 // pred_fallthru
      _
    %1290 = vsyncpa [#allocation4], 1
    %1291 = vsyncpa [#allocation5], 1

</llo_original>
